<compile_context>
chip_gen: v6e
topology: v6e:2x2x1
jax: 0.10.0
libtpu: 0.0.40
codegen_flags: <defaults>
</compile_context>

<pallas_src>
import functools

import jax
import jax.numpy as jnp
from jax.experimental import pallas as pl
from jax.experimental.pallas import tpu as pltpu


# ------------------------------ Pallas kernel -------------------------------

def _local_agg_kernel(x_ref, w0_ref, b0_ref, dw_ref, w1_ref, b1_ref, o_ref,
                      pad_ref, *, H, W, C):
    """Fused LocalAgg forward for one batch element.

    x_ref   : (1, H*W, C)   bf16  input pixels (NHWC, spatial flattened)
    w0_ref  : (C, C)        bf16  BN0-folded pointwise_conv_0 weight (in x out)
    b0_ref  : (1, C)        f32   BN0-folded bias
    dw_ref  : (3, 3, C)     f32   depthwise 3x3 weight
    w1_ref  : (C, C)        bf16  BN1-folded pointwise_conv_1 weight
    b1_ref  : (1, C)        f32   BN1-folded bias
    o_ref   : (1, H*W, C)   f32   output pixels
    pad_ref : (H+2, W+2, C) f32   VMEM scratch: zero-padded depthwise input
    """
    # Stage 1: BN0 + pointwise_conv_0  ->  one MXU matmul (bf16 in, f32 accum).
    y = jnp.dot(x_ref[0], w0_ref[...], preferred_element_type=jnp.float32)
    y = y + b0_ref[...]

    # Stage 2: depthwise 3x3 conv, stride 1, padding 1.  Build the zero-padded
    # intermediate in VMEM scratch and accumulate 9 unrolled VPU taps.
    pad_ref[...] = jnp.zeros_like(pad_ref)
    pad_ref[1:H + 1, 1:W + 1, :] = y.reshape(H, W, C)
    xp = pad_ref[...]                      # (H+2, W+2, C)
    k = dw_ref[...]                        # (3, 3, C)
    acc = jnp.zeros((H, W, C), jnp.float32)
    for di in range(3):
        for dj in range(3):
            acc = acc + xp[di:di + H, dj:dj + W, :] * k[di, dj, :]

    # Stage 3: BN1 + pointwise_conv_1  ->  second MXU matmul + bias.
    z = jnp.dot(acc.reshape(H * W, C).astype(w1_ref.dtype), w1_ref[...],
                preferred_element_type=jnp.float32)
    o_ref[0] = (z + b1_ref[...]).astype(o_ref.dtype)


# -------------------------------- wrapper ------------------------------------

def local_agg_forward(params, x, *, eps=1e-5):
    """LocalAgg forward. x: (N, C, H, W) NCHW (PyTorch convention) -> (N, C, H, W)."""
    N, C, H, W = x.shape

    # Fold eval-mode BatchNorm into the (bias-free) pointwise convs at trace time:
    #   pw(bn(v)) = v @ (s * W^T) + W @ t   with  s = g/sqrt(var+eps), t = b - m*s.
    s0 = params["bn0_g"] * jax.lax.rsqrt(params["bn0_v"] + eps)
    t0 = params["bn0_b"] - params["bn0_m"] * s0
    s1 = params["bn1_g"] * jax.lax.rsqrt(params["bn1_v"] + eps)
    t1 = params["bn1_b"] - params["bn1_m"] * s1
    w0 = (params["pw0_w"] * s0[None, :]).T.astype(jnp.bfloat16)       # (C_in, C_out)
    b0 = (params["pw0_w"] @ t0).reshape(1, C).astype(jnp.float32)
    w1 = (params["pw1_w"] * s1[None, :]).T.astype(jnp.bfloat16)
    b1 = (params["pw1_w"] @ t1).reshape(1, C).astype(jnp.float32)
    dw = jnp.transpose(params["dw_w"], (1, 2, 0)).astype(jnp.float32)  # (3, 3, C)

    # NCHW -> (N, H*W, C); bf16 at the pallas_call boundary halves input DMA bytes.
    x_rows = jnp.transpose(x, (0, 2, 3, 1)).reshape(N, H * W, C).astype(jnp.bfloat16)

    flops = N * (2 * 2 * (H * W) * C * C + 2 * 9 * (H * W) * C)
    bytes_accessed = (N * H * W * C * 2 + N * H * W * C * 4
                      + 2 * C * C * 2 + 2 * C * 4 + 9 * C * 4)

    out = pl.pallas_call(
        functools.partial(_local_agg_kernel, H=H, W=W, C=C),
        out_shape=jax.ShapeDtypeStruct((N, H * W, C), jnp.float32),
        grid=(N,),
        in_specs=[
            pl.BlockSpec((1, H * W, C), lambda n: (n, 0, 0)),
            pl.BlockSpec((C, C), lambda n: (0, 0)),
            pl.BlockSpec((1, C), lambda n: (0, 0)),
            pl.BlockSpec((3, 3, C), lambda n: (0, 0, 0)),
            pl.BlockSpec((C, C), lambda n: (0, 0)),
            pl.BlockSpec((1, C), lambda n: (0, 0)),
        ],
        out_specs=pl.BlockSpec((1, H * W, C), lambda n: (n, 0, 0)),
        scratch_shapes=[pltpu.VMEM((H + 2, W + 2, C), jnp.float32)],
        compiler_params=pltpu.CompilerParams(dimension_semantics=("parallel",)),
        cost_estimate=pl.CostEstimate(flops=flops, transcendentals=0,
                                      bytes_accessed=bytes_accessed),
    )(x_rows, w0, b0, dw, w1, b1)

    return jnp.transpose(out.reshape(N, H, W, C), (0, 3, 1, 2))


# ------------------------- pure-JAX f32 reference ----------------------------

def _bn_eval(x, g, b, m, v, eps=1e-5):
    s = g / jnp.sqrt(v + eps)
    return x * s[None, :, None, None] + (b - m * s)[None, :, None, None]


def local_agg_reference(params, x, *, eps=1e-5):
    """Mirrors the PyTorch module (eval-mode BatchNorm), all in f32 / NCHW."""
    N, C, H, W = x.shape
    x = _bn_eval(x, params["bn0_g"], params["bn0_b"], params["bn0_m"], params["bn0_v"], eps)
    x = jnp.einsum("oc,nchw->nohw", params["pw0_w"], x)
    xp = jnp.pad(x, ((0, 0), (0, 0), (1, 1), (1, 1)))
    acc = jnp.zeros_like(x)
    for i in range(3):
        for j in range(3):
            acc = acc + xp[:, :, i:i + H, j:j + W] * params["dw_w"][None, :, i, j, None, None]
    x = _bn_eval(acc, params["bn1_g"], params["bn1_b"], params["bn1_m"], params["bn1_v"], eps)
    x = jnp.einsum("oc,nchw->nohw", params["pw1_w"], x)
    return x


def init_params(key, channels):
    ks = jax.random.split(key, 11)
    n = jax.random.normal
    return {
        "bn0_g": 1.0 + 0.1 * n(ks[0], (channels,), jnp.float32),
        "bn0_b": 0.1 * n(ks[1], (channels,), jnp.float32),
        "bn0_m": 0.1 * n(ks[2], (channels,), jnp.float32),
        "bn0_v": 0.5 + jax.random.uniform(ks[3], (channels,), jnp.float32),
        "pw0_w": 0.1 * n(ks[4], (channels, channels), jnp.float32),    # (C_out, C_in)
        "dw_w": 0.2 * n(ks[5], (channels, 3, 3), jnp.float32),         # (C, kh, kw)
        "bn1_g": 1.0 + 0.1 * n(ks[6], (channels,), jnp.float32),
        "bn1_b": 0.1 * n(ks[7], (channels,), jnp.float32),
        "bn1_m": 0.1 * n(ks[8], (channels,), jnp.float32),
        "bn1_v": 0.5 + jax.random.uniform(ks[9], (channels,), jnp.float32),
        "pw1_w": 0.1 * n(ks[10], (channels, channels), jnp.float32),
    }


if __name__ == "__main__":
    key = jax.random.PRNGKey(0)
    kx, kp = jax.random.split(key)
    N, C, H, W = 2, 32, 16, 16
    x = jax.random.normal(kx, (N, C, H, W), jnp.float32)
    params = init_params(kp, C)

    fwd = jax.jit(local_agg_forward)
    out = jax.block_until_ready(fwd(params, x))

    ref = local_agg_reference(params, x)
    assert out.shape == (N, C, H, W), out.shape
    assert bool(jnp.allclose(out, ref, atol=5e-2, rtol=5e-2)), \
        float(jnp.max(jnp.abs(out - ref)))
    print("KERNEL_OK")
</pallas_src>

<mosaic_0001>
module attributes {stable_mosaic.version = 11 : i64} {
  func.func @_local_agg_kernel(%arg0: i32, %arg1: memref<1x256x32xbf16, #tpu.memory_space<vmem>>, %arg2: memref<32x32xbf16, #tpu.memory_space<vmem>>, %arg3: memref<1x32xf32, #tpu.memory_space<vmem>>, %arg4: memref<3x3x32xf32, #tpu.memory_space<vmem>>, %arg5: memref<32x32xbf16, #tpu.memory_space<vmem>>, %arg6: memref<1x32xf32, #tpu.memory_space<vmem>>, %arg7: memref<1x256x32xf32, #tpu.memory_space<vmem>>, %arg8: memref<18x18x32xf32, #tpu.memory_space<vmem>>) attributes {dimension_semantics = [#tpu.dimension_semantics<parallel>], iteration_bounds = array<i64: 2>, scalar_prefetch = 0 : i64, scratch_operands = 1 : i64, tpu.core_type = #tpu.core_type<tc>, window_params = [{transform_indices = @transform_0, window_bounds = array<i64: 1, 256, 32>}, {pipeline_mode = #tpu.pipeline_mode<synchronous>, transform_indices = @transform_1, window_bounds = array<i64: 32, 32>}, {pipeline_mode = #tpu.pipeline_mode<synchronous>, transform_indices = @transform_2, window_bounds = array<i64: 1, 32>}, {pipeline_mode = #tpu.pipeline_mode<synchronous>, transform_indices = @transform_3, window_bounds = array<i64: 3, 3, 32>}, {pipeline_mode = #tpu.pipeline_mode<synchronous>, transform_indices = @transform_4, window_bounds = array<i64: 32, 32>}, {pipeline_mode = #tpu.pipeline_mode<synchronous>, transform_indices = @transform_5, window_bounds = array<i64: 1, 32>}, {transform_indices = @transform_6, window_bounds = array<i64: 1, 256, 32>}]} {
    %c0 = arith.constant 0 : index
    %c0_0 = arith.constant 0 : index
    %c0_1 = arith.constant 0 : index
    %0 = vector.load %arg1[%c0, %c0_0, %c0_1] : memref<1x256x32xbf16, #tpu.memory_space<vmem>>, vector<1x256x32xbf16>
    %1 = vector.shape_cast %0 : vector<1x256x32xbf16> to vector<256x32xbf16>
    %c0_2 = arith.constant 0 : index
    %c0_3 = arith.constant 0 : index
    %2 = vector.load %arg2[%c0_2, %c0_3] : memref<32x32xbf16, #tpu.memory_space<vmem>>, vector<32x32xbf16>
    %cst = arith.constant dense<0.000000e+00> : vector<256x32xf32>
    %3 = tpu.matmul %1, %2, %cst {dimension_numbers = #tpu.dot_dimension_numbers<[1], [0], [0], [1], [0, 0, 1, 1], [], []>} : vector<256x32xbf16>, vector<32x32xbf16>, vector<256x32xf32> -> vector<256x32xf32>
    %c0_4 = arith.constant 0 : index
    %c0_5 = arith.constant 0 : index
    %4 = vector.load %arg3[%c0_4, %c0_5] : memref<1x32xf32, #tpu.memory_space<vmem>>, vector<1x32xf32>
    %5 = vector.broadcast %4 : vector<1x32xf32> to vector<256x32xf32>
    %6 = arith.addf %3, %5 : vector<256x32xf32>
    %cst_6 = arith.constant 0.000000e+00 : f32
    %7 = vector.broadcast %cst_6 : f32 to vector<18x18x32xf32>
    %c0_7 = arith.constant 0 : index
    %c0_8 = arith.constant 0 : index
    %c0_9 = arith.constant 0 : index
    %8 = vector.load %arg8[%c0_7, %c0_8, %c0_9] : memref<18x18x32xf32, #tpu.memory_space<vmem>>, vector<18x18x32xf32>
    tpu.vector_store %arg8[%c0_7, %c0_8, %c0_9], %7 {strides = array<i32>} : memref<18x18x32xf32, #tpu.memory_space<vmem>>, vector<18x18x32xf32>,
    %9 = vector.shape_cast %6 : vector<256x32xf32> to vector<16x16x32xf32>
    %c1 = arith.constant 1 : index
    %c1_10 = arith.constant 1 : index
    %c0_11 = arith.constant 0 : index
    %10 = vector.load %arg8[%c1, %c1_10, %c0_11] : memref<18x18x32xf32, #tpu.memory_space<vmem>>, vector<16x16x32xf32>
    tpu.vector_store %arg8[%c1, %c1_10, %c0_11], %9 {strides = array<i32>} : memref<18x18x32xf32, #tpu.memory_space<vmem>>, vector<16x16x32xf32>,
    %c0_12 = arith.constant 0 : index
    %c0_13 = arith.constant 0 : index
    %c0_14 = arith.constant 0 : index
    %11 = vector.load %arg8[%c0_12, %c0_13, %c0_14] : memref<18x18x32xf32, #tpu.memory_space<vmem>>, vector<18x18x32xf32>
    %c0_15 = arith.constant 0 : index
    %c0_16 = arith.constant 0 : index
    %c0_17 = arith.constant 0 : index
    %12 = vector.load %arg4[%c0_15, %c0_16, %c0_17] : memref<3x3x32xf32, #tpu.memory_space<vmem>>, vector<3x3x32xf32>
    %cst_18 = arith.constant 0.000000e+00 : f32
    %13 = vector.broadcast %cst_18 : f32 to vector<16x16x32xf32>
    %14 = vector.extract_strided_slice %11 {offsets = [0, 0, 0], sizes = [16, 16, 32], strides = [1, 1, 1]} : vector<18x18x32xf32> to vector<16x16x32xf32>
    %15 = vector.extract_strided_slice %12 {offsets = [0, 0, 0], sizes = [1, 1, 32], strides = [1, 1, 1]} : vector<3x3x32xf32> to vector<1x1x32xf32>
    %16 = vector.shape_cast %15 : vector<1x1x32xf32> to vector<32xf32>
    %17 = vector.shape_cast %16 : vector<32xf32> to vector<1x1x32xf32>
    %18 = vector.broadcast %17 : vector<1x1x32xf32> to vector<16x16x32xf32>
    %19 = arith.mulf %14, %18 : vector<16x16x32xf32>
    %20 = arith.addf %13, %19 : vector<16x16x32xf32>
    %21 = vector.extract_strided_slice %11 {offsets = [0, 1, 0], sizes = [16, 16, 32], strides = [1, 1, 1]} : vector<18x18x32xf32> to vector<16x16x32xf32>
    %22 = vector.extract_strided_slice %12 {offsets = [0, 1, 0], sizes = [1, 1, 32], strides = [1, 1, 1]} : vector<3x3x32xf32> to vector<1x1x32xf32>
    %23 = vector.shape_cast %22 : vector<1x1x32xf32> to vector<32xf32>
    %24 = vector.shape_cast %23 : vector<32xf32> to vector<1x1x32xf32>
    %25 = vector.broadcast %24 : vector<1x1x32xf32> to vector<16x16x32xf32>
    %26 = arith.mulf %21, %25 : vector<16x16x32xf32>
    %27 = arith.addf %20, %26 : vector<16x16x32xf32>
    %28 = vector.extract_strided_slice %11 {offsets = [0, 2, 0], sizes = [16, 16, 32], strides = [1, 1, 1]} : vector<18x18x32xf32> to vector<16x16x32xf32>
    %29 = vector.extract_strided_slice %12 {offsets = [0, 2, 0], sizes = [1, 1, 32], strides = [1, 1, 1]} : vector<3x3x32xf32> to vector<1x1x32xf32>
    %30 = vector.shape_cast %29 : vector<1x1x32xf32> to vector<32xf32>
    %31 = vector.shape_cast %30 : vector<32xf32> to vector<1x1x32xf32>
    %32 = vector.broadcast %31 : vector<1x1x32xf32> to vector<16x16x32xf32>
    %33 = arith.mulf %28, %32 : vector<16x16x32xf32>
    %34 = arith.addf %27, %33 : vector<16x16x32xf32>
    %35 = vector.extract_strided_slice %11 {offsets = [1, 0, 0], sizes = [16, 16, 32], strides = [1, 1, 1]} : vector<18x18x32xf32> to vector<16x16x32xf32>
    %36 = vector.extract_strided_slice %12 {offsets = [1, 0, 0], sizes = [1, 1, 32], strides = [1, 1, 1]} : vector<3x3x32xf32> to vector<1x1x32xf32>
    %37 = vector.shape_cast %36 : vector<1x1x32xf32> to vector<32xf32>
    %38 = vector.shape_cast %37 : vector<32xf32> to vector<1x1x32xf32>
    %39 = vector.broadcast %38 : vector<1x1x32xf32> to vector<16x16x32xf32>
    %40 = arith.mulf %35, %39 : vector<16x16x32xf32>
    %41 = arith.addf %34, %40 : vector<16x16x32xf32>
    %42 = vector.extract_strided_slice %11 {offsets = [1, 1, 0], sizes = [16, 16, 32], strides = [1, 1, 1]} : vector<18x18x32xf32> to vector<16x16x32xf32>
    %43 = vector.extract_strided_slice %12 {offsets = [1, 1, 0], sizes = [1, 1, 32], strides = [1, 1, 1]} : vector<3x3x32xf32> to vector<1x1x32xf32>
    %44 = vector.shape_cast %43 : vector<1x1x32xf32> to vector<32xf32>
    %45 = vector.shape_cast %44 : vector<32xf32> to vector<1x1x32xf32>
    %46 = vector.broadcast %45 : vector<1x1x32xf32> to vector<16x16x32xf32>
    %47 = arith.mulf %42, %46 : vector<16x16x32xf32>
    %48 = arith.addf %41, %47 : vector<16x16x32xf32>
    %49 = vector.extract_strided_slice %11 {offsets = [1, 2, 0], sizes = [16, 16, 32], strides = [1, 1, 1]} : vector<18x18x32xf32> to vector<16x16x32xf32>
    %50 = vector.extract_strided_slice %12 {offsets = [1, 2, 0], sizes = [1, 1, 32], strides = [1, 1, 1]} : vector<3x3x32xf32> to vector<1x1x32xf32>
    %51 = vector.shape_cast %50 : vector<1x1x32xf32> to vector<32xf32>
    %52 = vector.shape_cast %51 : vector<32xf32> to vector<1x1x32xf32>
    %53 = vector.broadcast %52 : vector<1x1x32xf32> to vector<16x16x32xf32>
    %54 = arith.mulf %49, %53 : vector<16x16x32xf32>
    %55 = arith.addf %48, %54 : vector<16x16x32xf32>
    %56 = vector.extract_strided_slice %11 {offsets = [2, 0, 0], sizes = [16, 16, 32], strides = [1, 1, 1]} : vector<18x18x32xf32> to vector<16x16x32xf32>
    %57 = vector.extract_strided_slice %12 {offsets = [2, 0, 0], sizes = [1, 1, 32], strides = [1, 1, 1]} : vector<3x3x32xf32> to vector<1x1x32xf32>
    %58 = vector.shape_cast %57 : vector<1x1x32xf32> to vector<32xf32>
    %59 = vector.shape_cast %58 : vector<32xf32> to vector<1x1x32xf32>
    %60 = vector.broadcast %59 : vector<1x1x32xf32> to vector<16x16x32xf32>
    %61 = arith.mulf %56, %60 : vector<16x16x32xf32>
    %62 = arith.addf %55, %61 : vector<16x16x32xf32>
    %63 = vector.extract_strided_slice %11 {offsets = [2, 1, 0], sizes = [16, 16, 32], strides = [1, 1, 1]} : vector<18x18x32xf32> to vector<16x16x32xf32>
    %64 = vector.extract_strided_slice %12 {offsets = [2, 1, 0], sizes = [1, 1, 32], strides = [1, 1, 1]} : vector<3x3x32xf32> to vector<1x1x32xf32>
    %65 = vector.shape_cast %64 : vector<1x1x32xf32> to vector<32xf32>
    %66 = vector.shape_cast %65 : vector<32xf32> to vector<1x1x32xf32>
    %67 = vector.broadcast %66 : vector<1x1x32xf32> to vector<16x16x32xf32>
    %68 = arith.mulf %63, %67 : vector<16x16x32xf32>
    %69 = arith.addf %62, %68 : vector<16x16x32xf32>
    %70 = vector.extract_strided_slice %11 {offsets = [2, 2, 0], sizes = [16, 16, 32], strides = [1, 1, 1]} : vector<18x18x32xf32> to vector<16x16x32xf32>
    %71 = vector.extract_strided_slice %12 {offsets = [2, 2, 0], sizes = [1, 1, 32], strides = [1, 1, 1]} : vector<3x3x32xf32> to vector<1x1x32xf32>
    %72 = vector.shape_cast %71 : vector<1x1x32xf32> to vector<32xf32>
    %73 = vector.shape_cast %72 : vector<32xf32> to vector<1x1x32xf32>
    %74 = vector.broadcast %73 : vector<1x1x32xf32> to vector<16x16x32xf32>
    %75 = arith.mulf %70, %74 : vector<16x16x32xf32>
    %76 = arith.addf %69, %75 : vector<16x16x32xf32>
    %77 = vector.shape_cast %76 : vector<16x16x32xf32> to vector<256x32xf32>
    %78 = arith.truncf %77 : vector<256x32xf32> to vector<256x32xbf16>
    %c0_19 = arith.constant 0 : index
    %c0_20 = arith.constant 0 : index
    %79 = vector.load %arg5[%c0_19, %c0_20] : memref<32x32xbf16, #tpu.memory_space<vmem>>, vector<32x32xbf16>
    %cst_21 = arith.constant dense<0.000000e+00> : vector<256x32xf32>
    %80 = tpu.matmul %78, %79, %cst_21 {dimension_numbers = #tpu.dot_dimension_numbers<[1], [0], [0], [1], [0, 0, 1, 1], [], []>} : vector<256x32xbf16>, vector<32x32xbf16>, vector<256x32xf32> -> vector<256x32xf32>
    %c0_22 = arith.constant 0 : index
    %c0_23 = arith.constant 0 : index
    %81 = vector.load %arg6[%c0_22, %c0_23] : memref<1x32xf32, #tpu.memory_space<vmem>>, vector<1x32xf32>
    %82 = vector.broadcast %81 : vector<1x32xf32> to vector<256x32xf32>
    %83 = arith.addf %80, %82 : vector<256x32xf32>
    %c0_24 = arith.constant 0 : index
    %c0_25 = arith.constant 0 : index
    %c0_26 = arith.constant 0 : index
    %84 = vector.load %arg7[%c0_24, %c0_25, %c0_26] : memref<1x256x32xf32, #tpu.memory_space<vmem>>, vector<1x256x32xf32>
    %85 = vector.shape_cast %84 : vector<1x256x32xf32> to vector<256x32xf32>
    %86 = vector.shape_cast %83 : vector<256x32xf32> to vector<1x256x32xf32>
    tpu.vector_store %arg7[%c0_24, %c0_25, %c0_26], %86 {strides = array<i32>} : memref<1x256x32xf32, #tpu.memory_space<vmem>>, vector<1x256x32xf32>,
    return
  }
  func.func @transform_0(%arg0: i32) -> (i32, i32, i32) {
    %c0_i32 = arith.constant 0 : i32
    %c0_i32_0 = arith.constant 0 : i32
    %c0_i32_1 = arith.constant 0 : i32
    return %arg0, %c0_i32, %c0_i32_0 : i32, i32, i32
  }
  func.func @transform_1(%arg0: i32) -> (i32, i32) {
    %c0_i32 = arith.constant 0 : i32
    %c0_i32_0 = arith.constant 0 : i32
    %c0_i32_1 = arith.constant 0 : i32
    return %c0_i32, %c0_i32_0 : i32, i32
  }
  func.func @transform_2(%arg0: i32) -> (i32, i32) {
    %c0_i32 = arith.constant 0 : i32
    %c0_i32_0 = arith.constant 0 : i32
    %c0_i32_1 = arith.constant 0 : i32
    return %c0_i32, %c0_i32_0 : i32, i32
  }
  func.func @transform_3(%arg0: i32) -> (i32, i32, i32) {
    %c0_i32 = arith.constant 0 : i32
    %c0_i32_0 = arith.constant 0 : i32
    %c0_i32_1 = arith.constant 0 : i32
    %c0_i32_2 = arith.constant 0 : i32
    return %c0_i32, %c0_i32_0, %c0_i32_1 : i32, i32, i32
  }
  func.func @transform_4(%arg0: i32) -> (i32, i32) {
    %c0_i32 = arith.constant 0 : i32
    %c0_i32_0 = arith.constant 0 : i32
    %c0_i32_1 = arith.constant 0 : i32
    return %c0_i32, %c0_i32_0 : i32, i32
  }
  func.func @transform_5(%arg0: i32) -> (i32, i32) {
    %c0_i32 = arith.constant 0 : i32
    %c0_i32_0 = arith.constant 0 : i32
    %c0_i32_1 = arith.constant 0 : i32
    return %c0_i32, %c0_i32_0 : i32, i32
  }
  func.func @transform_6(%arg0: i32) -> (i32, i32, i32) {
    %c0_i32 = arith.constant 0 : i32
    %c0_i32_0 = arith.constant 0 : i32
    %c0_i32_1 = arith.constant 0 : i32
    return %arg0, %c0_i32, %c0_i32_0 : i32, i32, i32
  }
}

</mosaic_0001>

<llo_original>
// kernel: local_agg_forward.1
$region0: #{local_agg_forward.1}
  #allocation0 [shape = 'u32[]', space=smem, size = 0x4, offset = 0x4, fixed_abs, tag = 'smem constant byte address 0x4 - core index']
  #allocation1 [shape = 'u32[144,128]{1,0:T(1,128)}', space=vmem, size = 0x12000, scoped, tag = 'internal scratch']
  #allocation2 [shape = 'f32[18,18,32]{2,1,0:T(8,128)}', space=vmem, size = 0x36000, scoped, tag = 'scratch operand']
  %s0 = inlined_call_operand.vmem [shape: bf16[2,256,32], index: 0, kind: input, shape index: {}]
  %s1 = inlined_call_operand.vmem [shape: bf16[32,32], index: 1, kind: input, shape index: {}]
  %s2 = inlined_call_operand.vmem [shape: f32[1,32], index: 2, kind: input, shape index: {}]
  %s3 = inlined_call_operand.vmem [shape: f32[3,3,32], index: 3, kind: input, shape index: {}]
  %s4 = inlined_call_operand.vmem [shape: bf16[32,32], index: 4, kind: input, shape index: {}]
  %s5 = inlined_call_operand.vmem [shape: f32[1,32], index: 5, kind: input, shape index: {}]
  %s6 = inlined_call_operand.hbm [shape: f32[2,256,32], index: 6, kind: output, shape index: {}]
  %s7 = sld [smem:[#allocation0]]
  $region57: #{local_agg_forward.1} parent=0
    _
  %s9 = ssub.s32 1, %s7
  %s10 = scalar_select 0, %s9, %s7
  $region1: #{local_agg_forward.1} parent=0
    #allocation3 [shape = 'u8[262144]{0}', space=vmem, size = 0x40000, scoped, tag = 'output window, operand 0']
    #allocation4 [shape = 's32[2]{0}', space=sflag, size = 0x8, scoped, tag = 'scoped memory for local_agg_forward.1']
    %11 = vsyncpa [#allocation4], 0
    %s12 = scalar_lea.sflag [#allocation4], 1
    %13 = vsyncpa %s12, 0
    loop: start=0, step=1, limit=4
    $region2: #{local_agg_forward.1} parent=1 // loop_pre_header
      _
    $region3: #{local_agg_forward.1} parent=1 // loop_header
      %s15 = sphi 0, %s19
      %p16 = scmp.ge.s32.totalorder %s15, 4
      %s25 = sphi 0, %s27
      %s28 = sphi 0, %s25
      %s29 = sphi 0, %s28
      %s45 = sphi 0, %s29
      %s49 = sphi 0, %s49
      %s51 = sphi 0, %s49
      %s52 = sphi 0, %s51
      %s66 = sphi 0, %s52
      %s70 = sphi 0, %s70
      %s72 = sphi 0, %s70
      %s73 = sphi 0, %s72
      %s87 = sphi 0, %s73
      %s91 = sphi 0, %s91
      %s93 = sphi 0, %s91
      %s94 = sphi 0, %s93
      %s108 = sphi 0, %s94
      %s112 = sphi 0, %s112
      %s114 = sphi 0, %s112
      %s115 = sphi 0, %s114
      %s129 = sphi 0, %s115
      %s133 = sphi 0, %s133
      %s135 = sphi 0, %s133
      %s136 = sphi 0, %s135
      %s150 = sphi 0, %s136
      %s156 = sphi 0, %s158
      %s159 = sphi 0, %s156
      %s160 = sphi 0, %s159
      %s176 = sphi 0, %s160
    $region4: #{local_agg_forward.1} parent=1 // loop_header_branch
      %18 = sbr.rel (%p16) target = $region8
    $region5: #{local_agg_forward.1} parent=1 // loop_body
      %s20 = ssub.s32 %s15, 1
      %s21 = ssub.s32 %s15, 2
      %s22 = sadd.s32 %s15, 1
      %s23 = ssub.s32 %s15, %s22
      %p24 = scmp.eq.s32.totalorder %s23, 0
      %s26 = sadd.s32 %s25, 1
      %s27 = scalar_select %p24, %s25, %s26
      %p30 = pneg %p24
      %p31 = scmp.eq.s32.totalorder %s15, 1
      %p32 = por %p30, %p31
      %p33 = scmp.ne.s32.totalorder %s25, %s28
      %p34 = scmp.eq.s32.totalorder %s15, 0
      %p35 = por %p33, %p34
      %p36 = scmp.ne.s32.totalorder %s25, %s28
      %p37 = scmp.eq.s32.totalorder %s20, 1
      %p38 = por %p36, %p37
      %p39 = scmp.ne.s32.totalorder %s28, %s29
      %p40 = scmp.eq.s32.totalorder %s20, 0
      %p41 = por %p39, %p40
      %p42 = scmp.ne.s32.totalorder %s28, %s29
      %p43 = scmp.eq.s32.totalorder %s21, 1
      %p44 = por %p42, %p43
      %p46 = scmp.ne.s32.totalorder %s29, %s45
      %p47 = scmp.eq.s32.totalorder %s21, 0
      %p48 = por %p46, %p47
      %s50 = sadd.s32 %s49, 1
      %p53 = scmp.eq.s32.totalorder %s15, 1
      %p54 = scmp.ne.s32.totalorder %s49, %s51
      %p55 = scmp.eq.s32.totalorder %s15, 0
      %p56 = por %p54, %p55
      %p57 = scmp.ne.s32.totalorder %s49, %s51
      %p58 = scmp.eq.s32.totalorder %s20, 1
      %p59 = por %p57, %p58
      %p60 = scmp.ne.s32.totalorder %s51, %s52
      %p61 = scmp.eq.s32.totalorder %s20, 0
      %p62 = por %p60, %p61
      %p63 = scmp.ne.s32.totalorder %s51, %s52
      %p64 = scmp.eq.s32.totalorder %s21, 1
      %p65 = por %p63, %p64
      %p67 = scmp.ne.s32.totalorder %s52, %s66
      %p68 = scmp.eq.s32.totalorder %s21, 0
      %p69 = por %p67, %p68
      %s71 = sadd.s32 %s70, 1
      %p74 = scmp.eq.s32.totalorder %s15, 1
      %p75 = scmp.ne.s32.totalorder %s70, %s72
      %p76 = scmp.eq.s32.totalorder %s15, 0
      %p77 = por %p75, %p76
      %p78 = scmp.ne.s32.totalorder %s70, %s72
      %p79 = scmp.eq.s32.totalorder %s20, 1
      %p80 = por %p78, %p79
      %p81 = scmp.ne.s32.totalorder %s72, %s73
      %p82 = scmp.eq.s32.totalorder %s20, 0
      %p83 = por %p81, %p82
      %p84 = scmp.ne.s32.totalorder %s72, %s73
      %p85 = scmp.eq.s32.totalorder %s21, 1
      %p86 = por %p84, %p85
      %p88 = scmp.ne.s32.totalorder %s73, %s87
      %p89 = scmp.eq.s32.totalorder %s21, 0
      %p90 = por %p88, %p89
      %s92 = sadd.s32 %s91, 1
      %p95 = scmp.eq.s32.totalorder %s15, 1
      %p96 = scmp.ne.s32.totalorder %s91, %s93
      %p97 = scmp.eq.s32.totalorder %s15, 0
      %p98 = por %p96, %p97
      %p99 = scmp.ne.s32.totalorder %s91, %s93
      %p100 = scmp.eq.s32.totalorder %s20, 1
      %p101 = por %p99, %p100
      %p102 = scmp.ne.s32.totalorder %s93, %s94
      %p103 = scmp.eq.s32.totalorder %s20, 0
      %p104 = por %p102, %p103
      %p105 = scmp.ne.s32.totalorder %s93, %s94
      %p106 = scmp.eq.s32.totalorder %s21, 1
      %p107 = por %p105, %p106
      %p109 = scmp.ne.s32.totalorder %s94, %s108
      %p110 = scmp.eq.s32.totalorder %s21, 0
      %p111 = por %p109, %p110
      %s113 = sadd.s32 %s112, 1
      %p116 = scmp.eq.s32.totalorder %s15, 1
      %p117 = scmp.ne.s32.totalorder %s112, %s114
      %p118 = scmp.eq.s32.totalorder %s15, 0
      %p119 = por %p117, %p118
      %p120 = scmp.ne.s32.totalorder %s112, %s114
      %p121 = scmp.eq.s32.totalorder %s20, 1
      %p122 = por %p120, %p121
      %p123 = scmp.ne.s32.totalorder %s114, %s115
      %p124 = scmp.eq.s32.totalorder %s20, 0
      %p125 = por %p123, %p124
      %p126 = scmp.ne.s32.totalorder %s114, %s115
      %p127 = scmp.eq.s32.totalorder %s21, 1
      %p128 = por %p126, %p127
      %p130 = scmp.ne.s32.totalorder %s115, %s129
      %p131 = scmp.eq.s32.totalorder %s21, 0
      %p132 = por %p130, %p131
      %s134 = sadd.s32 %s133, 1
      %p137 = scmp.eq.s32.totalorder %s15, 1
      %p138 = scmp.ne.s32.totalorder %s133, %s135
      %p139 = scmp.eq.s32.totalorder %s15, 0
      %p140 = por %p138, %p139
      %p141 = scmp.ne.s32.totalorder %s133, %s135
      %p142 = scmp.eq.s32.totalorder %s20, 1
      %p143 = por %p141, %p142
      %p144 = scmp.ne.s32.totalorder %s135, %s136
      %p145 = scmp.eq.s32.totalorder %s20, 0
      %p146 = por %p144, %p145
      %p147 = scmp.ne.s32.totalorder %s135, %s136
      %p148 = scmp.eq.s32.totalorder %s21, 1
      %p149 = por %p147, %p148
      %p151 = scmp.ne.s32.totalorder %s136, %s150
      %p152 = scmp.eq.s32.totalorder %s21, 0
      %p153 = por %p151, %p152
      %s154 = ssub.s32 %s15, %s22
      %p155 = scmp.eq.s32.totalorder %s154, 0
      %s157 = sadd.s32 %s156, 1
      %s158 = scalar_select %p155, %s156, %s157
      %p161 = pneg %p155
      %p162 = scmp.eq.s32.totalorder %s15, 1
      %p163 = por %p161, %p162
      %p164 = scmp.ne.s32.totalorder %s156, %s159
      %p165 = scmp.eq.s32.totalorder %s15, 0
      %p166 = por %p164, %p165
      %p167 = scmp.ne.s32.totalorder %s156, %s159
      %p168 = scmp.eq.s32.totalorder %s20, 1
      %p169 = por %p167, %p168
      %p170 = scmp.ne.s32.totalorder %s159, %s160
      %p171 = scmp.eq.s32.totalorder %s20, 0
      %p172 = por %p170, %p171
      %p173 = scmp.ne.s32.totalorder %s159, %s160
      %p174 = scmp.eq.s32.totalorder %s21, 1
      %p175 = por %p173, %p174
      %p177 = scmp.ne.s32.totalorder %s160, %s176
      %p178 = scmp.eq.s32.totalorder %s21, 0
      %p179 = por %p177, %p178
      %p180 = scmp.le.s32.totalorder 1, %s15
      %p181 = scmp.lt.s32.totalorder %s15, 3
      %p182 = pnand %p180, %p181
      %p183 = pneg %p182
      // Predicated region
      $region9: #{local_agg_forward.1} parent=5 // pred_check
        _
      $region10: #{local_agg_forward.1} parent=5 // pred_check_branch
        %185 = sbr.rel (%p182) target = $region12
      $region11: #{local_agg_forward.1} parent=5 // pred_region
        %s186 = ssub.s32 %s15, 1
        // Predicated region
        $region13: #{local_agg_forward.1} parent=11 // pred_check
          %p187 = pneg %p62
        $region14: #{local_agg_forward.1} parent=11 // pred_check_branch
          %189 = sbr.rel (%p187) target = $region16
        $region15: #{local_agg_forward.1} parent=11 // pred_region
          _
        $region16: #{local_agg_forward.1} parent=11 // pred_fallthru
          _
        // Predicated region
        $region17: #{local_agg_forward.1} parent=11 // pred_check
          %p190 = pneg %p83
        $region18: #{local_agg_forward.1} parent=11 // pred_check_branch
          %192 = sbr.rel (%p190) target = $region20
        $region19: #{local_agg_forward.1} parent=11 // pred_region
          _
        $region20: #{local_agg_forward.1} parent=11 // pred_fallthru
          _
        // Predicated region
        $region21: #{local_agg_forward.1} parent=11 // pred_check
          %p193 = pneg %p104
        $region22: #{local_agg_forward.1} parent=11 // pred_check_branch
          %195 = sbr.rel (%p193) target = $region24
        $region23: #{local_agg_forward.1} parent=11 // pred_region
          _
        $region24: #{local_agg_forward.1} parent=11 // pred_fallthru
          _
        // Predicated region
        $region25: #{local_agg_forward.1} parent=11 // pred_check
          %p196 = pneg %p125
        $region26: #{local_agg_forward.1} parent=11 // pred_check_branch
          %198 = sbr.rel (%p196) target = $region28
        $region27: #{local_agg_forward.1} parent=11 // pred_region
          _
        $region28: #{local_agg_forward.1} parent=11 // pred_fallthru
          _
        // Predicated region
        $region29: #{local_agg_forward.1} parent=11 // pred_check
          %p199 = pneg %p146
        $region30: #{local_agg_forward.1} parent=11 // pred_check_branch
          %201 = sbr.rel (%p199) target = $region32
        $region31: #{local_agg_forward.1} parent=11 // pred_region
          _
        $region32: #{local_agg_forward.1} parent=11 // pred_fallthru
          _
      $region12: #{local_agg_forward.1} parent=5 // pred_fallthru
        _
      %p202 = scmp.lt.s32.totalorder %s15, 2
      // Predicated region
      $region33: #{local_agg_forward.1} parent=5 // pred_check
        %p203 = pneg %p202
      $region34: #{local_agg_forward.1} parent=5 // pred_check_branch
        %205 = sbr.rel (%p203) target = $region36
      $region35: #{local_agg_forward.1} parent=5 // pred_region
        // Predicated region
        $region37: #{local_agg_forward.1} parent=35 // pred_check
          %p206 = pneg %p35
        $region38: #{local_agg_forward.1} parent=35 // pred_check_branch
          %208 = sbr.rel (%p206) target = $region40
        $region39: #{local_agg_forward.1} parent=35 // pred_region
          %p209 = scmp.lt.s32.totalorder %s15, 1
          %s210 = scalar_select %p209, %s15, 1
          %s211 = smul.addr %s210, 32
          %s212 = smul.addr %s211, 4
          %s213 = scalar_lea.vmem %s0, %s212
        $region40: #{local_agg_forward.1} parent=35 // pred_fallthru
          _
      $region36: #{local_agg_forward.1} parent=5 // pred_fallthru
        _
      %p214 = scmp.le.s32.totalorder 1, %s15
      %p215 = scmp.lt.s32.totalorder %s15, 3
      %p216 = pnand %p214, %p215
      %p217 = pneg %p216
      // Predicated region
      $region41: #{local_agg_forward.1} parent=5 // pred_check
        _
      $region42: #{local_agg_forward.1} parent=5 // pred_check_branch
        %219 = sbr.rel (%p216) target = $region44
      $region43: #{local_agg_forward.1} parent=5 // pred_region
        %s220 = ssub.s32 %s15, 1
        %p221 = scmp.lt.s32.totalorder %s20, 1
        %s222 = scalar_select %p221, %s20, 1
        %s223 = smul.addr %s222, 32
        %s224 = smul.addr %s223, 4
        %s225 = scalar_lea.vmem %s0, %s224
        %p226 = pneg %p41
        %p227 = pneg %p38
        %p228 = pneg %p62
        %p229 = pneg %p59
        %p230 = pneg %p83
        %p231 = pneg %p80
        %p232 = pneg %p104
        %p233 = pneg %p101
        %p234 = pneg %p125
        %p235 = pneg %p122
        %p236 = pneg %p146
        %p237 = pneg %p143
        %p238 = pneg %p172
        %p239 = pneg %p169
        %s240 = sand.u32 %s159, 1
        %s241 = scalar_lea.sflag [#allocation4], %s240
        %s242 = sand.u32 %s159, 1
        %s243 = smul.addr %s242, 256
        %s244 = scalar_lea.vmem [#allocation3], %s243
        %p245 = scmp.lt.s32.totalorder %s20, 1
        %s246 = scalar_select %p245, %s20, 1
        %s247 = smul.addr %s246, 32
        %s248 = smul.addr %s247, 4
        %s249 = scalar_lea.vmem %s0, %s248
        %v251 = vld [vmem:[%s249] sm:$0xf]
        %v252 = vld [vmem:[%s249 + $0x4] sm:$0xf]
        %v253 = vld [vmem:[%s249 + $0x8] sm:$0xf]
        %v254 = vld [vmem:[%s249 + $0xc] sm:$0xf]
        %v255 = vld [vmem:[%s249 + $0x10] sm:$0xf]
        %v256 = vld [vmem:[%s249 + $0x14] sm:$0xf]
        %v257 = vld [vmem:[%s249 + $0x18] sm:$0xf]
        %v258 = vld [vmem:[%s249 + $0x1c] sm:$0xf]
        %v259 = vld [vmem:[%s249 + $0x20] sm:$0xf]
        %v260 = vld [vmem:[%s249 + $0x24] sm:$0xf]
        %v261 = vld [vmem:[%s249 + $0x28] sm:$0xf]
        %v262 = vld [vmem:[%s249 + $0x2c] sm:$0xf]
        %v263 = vld [vmem:[%s249 + $0x30] sm:$0xf]
        %v264 = vld [vmem:[%s249 + $0x34] sm:$0xf]
        %v265 = vld [vmem:[%s249 + $0x38] sm:$0xf]
        %v266 = vld [vmem:[%s249 + $0x3c] sm:$0xf]
        %v267 = vld [vmem:[%s249 + $0x40] sm:$0xf]
        %v268 = vld [vmem:[%s249 + $0x44] sm:$0xf]
        %v269 = vld [vmem:[%s249 + $0x48] sm:$0xf]
        %v270 = vld [vmem:[%s249 + $0x4c] sm:$0xf]
        %v271 = vld [vmem:[%s249 + $0x50] sm:$0xf]
        %v272 = vld [vmem:[%s249 + $0x54] sm:$0xf]
        %v273 = vld [vmem:[%s249 + $0x58] sm:$0xf]
        %v274 = vld [vmem:[%s249 + $0x5c] sm:$0xf]
        %v275 = vld [vmem:[%s249 + $0x60] sm:$0xf]
        %v276 = vld [vmem:[%s249 + $0x64] sm:$0xf]
        %v277 = vld [vmem:[%s249 + $0x68] sm:$0xf]
        %v278 = vld [vmem:[%s249 + $0x6c] sm:$0xf]
        %v279 = vld [vmem:[%s249 + $0x70] sm:$0xf]
        %v280 = vld [vmem:[%s249 + $0x74] sm:$0xf]
        %v281 = vld [vmem:[%s249 + $0x78] sm:$0xf]
        %v282 = vld [vmem:[%s249 + $0x7c] sm:$0xf]
        %v283 = vld [vmem:[%s1] sm:$0xf]
        %v284 = vld [vmem:[%s1 + $0x4] sm:$0xf]
        %v285 = vld [vmem:[%s1 + $0x8] sm:$0xf]
        %v286 = vld [vmem:[%s1 + $0xc] sm:$0xf]
        %v287 = vld [vmem:[%s2] sm:$0x1]
        %v289 = vlaneseq
        %v290 = vshrl.u32 %v289, 7
        %v291 = vsub.s32 0, %v290
        %v292 = vrot.slane %v287, %v291
        %v326 = vunpack.c.l.b16 %v251
        %v327 = vunpack.c.l.b16 %v252
        %v328 = vunpack.c.l.b16 %v253
        %v329 = vunpack.c.l.b16 %v254
        %v330 = vunpack.c.l.b16 %v255
        %v331 = vunpack.c.l.b16 %v256
        %v332 = vunpack.c.l.b16 %v257
        %v333 = vunpack.c.l.b16 %v258
        %v334 = vunpack.c.l.b16 %v259
        %v335 = vunpack.c.l.b16 %v260
        %v336 = vunpack.c.l.b16 %v261
        %v337 = vunpack.c.l.b16 %v262
        %v338 = vunpack.c.l.b16 %v263
        %v339 = vunpack.c.l.b16 %v264
        %v340 = vunpack.c.l.b16 %v265
        %v341 = vunpack.c.l.b16 %v266
        %v342 = vunpack.c.l.b16 %v267
        %v343 = vunpack.c.l.b16 %v268
        %v344 = vunpack.c.l.b16 %v269
        %v345 = vunpack.c.l.b16 %v270
        %v346 = vunpack.c.l.b16 %v271
        %v347 = vunpack.c.l.b16 %v272
        %v348 = vunpack.c.l.b16 %v273
        %v349 = vunpack.c.l.b16 %v274
        %v350 = vunpack.c.l.b16 %v275
        %v351 = vunpack.c.l.b16 %v276
        %v352 = vunpack.c.l.b16 %v277
        %v353 = vunpack.c.l.b16 %v278
        %v354 = vunpack.c.l.b16 %v279
        %v355 = vunpack.c.l.b16 %v280
        %v356 = vunpack.c.l.b16 %v281
        %v357 = vunpack.c.l.b16 %v282
        %v358 = vpack.c.b16 %v327, %v326
        %v359 = vpack.c.b16 %v329, %v328
        %v360 = vpack.c.b16 %v331, %v330
        %v361 = vpack.c.b16 %v333, %v332
        %v362 = vpack.c.b16 %v335, %v334
        %v363 = vpack.c.b16 %v337, %v336
        %v364 = vpack.c.b16 %v339, %v338
        %v365 = vpack.c.b16 %v341, %v340
        %v366 = vpack.c.b16 %v343, %v342
        %v367 = vpack.c.b16 %v345, %v344
        %v368 = vpack.c.b16 %v347, %v346
        %v369 = vpack.c.b16 %v349, %v348
        %v370 = vpack.c.b16 %v351, %v350
        %v371 = vpack.c.b16 %v353, %v352
        %v372 = vpack.c.b16 %v355, %v354
        %v373 = vpack.c.b16 %v357, %v356
        %v378 = vunpack.c.l.b16 %v283
        %v379 = vunpack.c.l.b16 %v284
        %v380 = vunpack.c.l.b16 %v285
        %v381 = vunpack.c.l.b16 %v286
        %v382 = vpack.c.b16 %v379, %v378
        %v383 = vpack.c.b16 %v381, %v380
        %vm386 = vcmask 261120
        %v388 = vsel %vm386, %v358, 0
        %v391 = vsel %vm386, %v359, 0
        %v394 = vsel %vm386, %v360, 0
        %v397 = vsel %vm386, %v361, 0
        %v400 = vsel %vm386, %v362, 0
        %v403 = vsel %vm386, %v363, 0
        %v406 = vsel %vm386, %v364, 0
        %v409 = vsel %vm386, %v365, 0
        %v412 = vsel %vm386, %v366, 0
        %v415 = vsel %vm386, %v367, 0
        %v418 = vsel %vm386, %v368, 0
        %v421 = vsel %vm386, %v369, 0
        %v424 = vsel %vm386, %v370, 0
        %v427 = vsel %vm386, %v371, 0
        %v430 = vsel %vm386, %v372, 0
        %v433 = vsel %vm386, %v373, 0
        %435 = vmatprep.subr.bf16.mxu0 0
        %436 = vmatpush1.bf16.msra.mxu0 0
        %437 = vmatprep.subr.bf16.mxu0 0
        %438 = vmatpush1.bf16.msra.mxu0 0
        %439 = vmatprep.subr.bf16.mxu0 0
        %440 = vmatpush1.bf16.msra.mxu0 0
        %441 = vmatprep.subr.bf16.mxu0 0
        %442 = vmatpush1.bf16.msra.mxu0 0
        %443 = vmatprep.subr.bf16.mxu0 0
        %444 = vmatpush1.bf16.msra.mxu0 0
        %445 = vmatprep.subr.bf16.mxu0 0
        %446 = vmatpush1.bf16.msra.mxu0 0
        %447 = vmatprep.subr.bf16.mxu0 0
        %448 = vmatpush1.bf16.msra.mxu0 %v383
        %449 = vmatprep.subr.bf16.mxu0 0
        %450 = vmatpush1.bf16.msra.mxu0 %v382
        %451 = vmatprep.subr.bf16.mxu0 0
        %452 = vmatpush2.bf16.msra.mxu0 0
        %453 = vmatprep.subr.bf16.mxu0 0
        %454 = vmatpush2.bf16.msra.mxu0 0
        %455 = vmatprep.subr.bf16.mxu0 0
        %456 = vmatpush2.bf16.msra.mxu0 0
        %457 = vmatprep.subr.bf16.mxu0 0
        %458 = vmatpush2.bf16.msra.mxu0 0
        %459 = vmatprep.subr.bf16.mxu0 0
        %460 = vmatpush2.bf16.msra.mxu0 0
        %461 = vmatprep.subr.bf16.mxu0 0
        %462 = vmatpush2.bf16.msra.mxu0 0
        %463 = vmatprep.subr.bf16.mxu0 0
        %464 = vmatpush2.bf16.msra.mxu0 0
        %465 = vmatprep.subr.bf16.mxu0 0
        %466 = vmatpush2.bf16.msra.mxu0 0
        %467 = vmatprep.mubr.bf16.mxu0 0
        %468 = vmatmul.mubr.bf16.gmra.mxu0 %v388
        %v469 = vpop.f32.mrf.mxu0
        %v470 = vadd.f32 %v292, %v469
        %v471 = vpop.f32.mrf.mxu0
        %v472 = vpop.f32.mrf.mxu0
        %v473 = vadd.f32 %v292, %v472
        %v474 = vpop.f32.mrf.mxu0
        %475 = vmatprep.mubr.bf16.mxu0 0
        %476 = vmatmul.mubr.bf16.gmra.mxu0 %v391
        %v477 = vpop.f32.mrf.mxu0
        %v478 = vadd.f32 %v292, %v477
        %v479 = vpop.f32.mrf.mxu0
        %v480 = vpop.f32.mrf.mxu0
        %v481 = vadd.f32 %v292, %v480
        %v482 = vpop.f32.mrf.mxu0
        %483 = vmatprep.mubr.bf16.mxu0 0
        %484 = vmatmul.mubr.bf16.gmra.mxu0 %v394
        %v485 = vpop.f32.mrf.mxu0
        %v486 = vadd.f32 %v292, %v485
        %v487 = vpop.f32.mrf.mxu0
        %v488 = vpop.f32.mrf.mxu0
        %v489 = vadd.f32 %v292, %v488
        %v490 = vpop.f32.mrf.mxu0
        %491 = vmatprep.mubr.bf16.mxu0 0
        %492 = vmatmul.mubr.bf16.gmra.mxu0 %v397
        %v493 = vpop.f32.mrf.mxu0
        %v494 = vadd.f32 %v292, %v493
        %v495 = vpop.f32.mrf.mxu0
        %v496 = vpop.f32.mrf.mxu0
        %v497 = vadd.f32 %v292, %v496
        %v498 = vpop.f32.mrf.mxu0
        %499 = vmatprep.mubr.bf16.mxu0 0
        %500 = vmatmul.mubr.bf16.gmra.mxu0 %v400
        %v501 = vpop.f32.mrf.mxu0
        %v502 = vadd.f32 %v292, %v501
        %v503 = vpop.f32.mrf.mxu0
        %v504 = vpop.f32.mrf.mxu0
        %v505 = vadd.f32 %v292, %v504
        %v506 = vpop.f32.mrf.mxu0
        %507 = vmatprep.mubr.bf16.mxu0 0
        %508 = vmatmul.mubr.bf16.gmra.mxu0 %v403
        %v509 = vpop.f32.mrf.mxu0
        %v510 = vadd.f32 %v292, %v509
        %v511 = vpop.f32.mrf.mxu0
        %v512 = vpop.f32.mrf.mxu0
        %v513 = vadd.f32 %v292, %v512
        %v514 = vpop.f32.mrf.mxu0
        %515 = vmatprep.mubr.bf16.mxu0 0
        %516 = vmatmul.mubr.bf16.gmra.mxu0 %v406
        %v517 = vpop.f32.mrf.mxu0
        %v518 = vadd.f32 %v292, %v517
        %v519 = vpop.f32.mrf.mxu0
        %v520 = vpop.f32.mrf.mxu0
        %v521 = vadd.f32 %v292, %v520
        %v522 = vpop.f32.mrf.mxu0
        %523 = vmatprep.mubr.bf16.mxu0 0
        %524 = vmatmul.mubr.bf16.gmra.mxu0 %v409
        %v525 = vpop.f32.mrf.mxu0
        %v526 = vadd.f32 %v292, %v525
        %v527 = vpop.f32.mrf.mxu0
        %v528 = vpop.f32.mrf.mxu0
        %v529 = vadd.f32 %v292, %v528
        %v530 = vpop.f32.mrf.mxu0
        %531 = vmatprep.mubr.bf16.mxu0 0
        %532 = vmatmul.mubr.bf16.gmra.mxu0 %v412
        %v533 = vpop.f32.mrf.mxu0
        %v534 = vadd.f32 %v292, %v533
        %v535 = vpop.f32.mrf.mxu0
        %v536 = vpop.f32.mrf.mxu0
        %v537 = vadd.f32 %v292, %v536
        %v538 = vpop.f32.mrf.mxu0
        %539 = vmatprep.mubr.bf16.mxu0 0
        %540 = vmatmul.mubr.bf16.gmra.mxu0 %v415
        %v541 = vpop.f32.mrf.mxu0
        %v542 = vadd.f32 %v292, %v541
        %v543 = vpop.f32.mrf.mxu0
        %v544 = vpop.f32.mrf.mxu0
        %v545 = vadd.f32 %v292, %v544
        %v546 = vpop.f32.mrf.mxu0
        %547 = vmatprep.mubr.bf16.mxu0 0
        %548 = vmatmul.mubr.bf16.gmra.mxu0 %v418
        %v549 = vpop.f32.mrf.mxu0
        %v550 = vadd.f32 %v292, %v549
        %v551 = vpop.f32.mrf.mxu0
        %v552 = vpop.f32.mrf.mxu0
        %v553 = vadd.f32 %v292, %v552
        %v554 = vpop.f32.mrf.mxu0
        %555 = vmatprep.mubr.bf16.mxu0 0
        %556 = vmatmul.mubr.bf16.gmra.mxu0 %v421
        %v557 = vpop.f32.mrf.mxu0
        %v558 = vadd.f32 %v292, %v557
        %v559 = vpop.f32.mrf.mxu0
        %v560 = vpop.f32.mrf.mxu0
        %v561 = vadd.f32 %v292, %v560
        %v562 = vpop.f32.mrf.mxu0
        %563 = vmatprep.mubr.bf16.mxu0 0
        %564 = vmatmul.mubr.bf16.gmra.mxu0 %v424
        %v565 = vpop.f32.mrf.mxu0
        %v566 = vadd.f32 %v292, %v565
        %v567 = vpop.f32.mrf.mxu0
        %v568 = vpop.f32.mrf.mxu0
        %v569 = vadd.f32 %v292, %v568
        %v570 = vpop.f32.mrf.mxu0
        %571 = vmatprep.mubr.bf16.mxu0 0
        %572 = vmatmul.mubr.bf16.gmra.mxu0 %v427
        %v573 = vpop.f32.mrf.mxu0
        %v574 = vadd.f32 %v292, %v573
        %v575 = vpop.f32.mrf.mxu0
        %v576 = vpop.f32.mrf.mxu0
        %v577 = vadd.f32 %v292, %v576
        %v578 = vpop.f32.mrf.mxu0
        %579 = vmatprep.mubr.bf16.mxu0 0
        %580 = vmatmul.mubr.bf16.gmra.mxu0 %v430
        %v581 = vpop.f32.mrf.mxu0
        %v582 = vadd.f32 %v292, %v581
        %v583 = vpop.f32.mrf.mxu0
        %v584 = vpop.f32.mrf.mxu0
        %v585 = vadd.f32 %v292, %v584
        %v586 = vpop.f32.mrf.mxu0
        %587 = vmatprep.mubr.bf16.mxu0 0
        %588 = vmatmul.mubr.bf16.gmra.mxu0 %v433
        %v589 = vpop.f32.mrf.mxu0
        %v590 = vadd.f32 %v292, %v589
        %v591 = vpop.f32.mrf.mxu0
        %v592 = vpop.f32.mrf.mxu0
        %v593 = vadd.f32 %v292, %v592
        %v594 = vpop.f32.mrf.mxu0
        %595 = vdwg.mxu0
        %596 = vst.msk [vmem:[#allocation2] sm:$0xff] %vm386, 0.0
        %597 = vst.msk [vmem:[#allocation2 + $0x8] sm:$0xff] %vm386, 0.0
        %vm598 = vcmask 254976
        %599 = vst.msk [vmem:[#allocation2 + $0x10] sm:$0x3] %vm598, 0.0
        %600 = vst.msk [vmem:[#allocation2 + $0x18] sm:$0xff] %vm386, 0.0
        %601 = vst.msk [vmem:[#allocation2 + $0x20] sm:$0xff] %vm386, 0.0
        %602 = vst.msk [vmem:[#allocation2 + $0x28] sm:$0x3] %vm598, 0.0
        %603 = vst.msk [vmem:[#allocation2 + $0x30] sm:$0xff] %vm386, 0.0
        %604 = vst.msk [vmem:[#allocation2 + $0x38] sm:$0xff] %vm386, 0.0
        %605 = vst.msk [vmem:[#allocation2 + $0x40] sm:$0x3] %vm598, 0.0
        %606 = vst.msk [vmem:[#allocation2 + $0x48] sm:$0xff] %vm386, 0.0
        %607 = vst.msk [vmem:[#allocation2 + $0x50] sm:$0xff] %vm386, 0.0
        %608 = vst.msk [vmem:[#allocation2 + $0x58] sm:$0x3] %vm598, 0.0
        %609 = vst.msk [vmem:[#allocation2 + $0x60] sm:$0xff] %vm386, 0.0
        %610 = vst.msk [vmem:[#allocation2 + $0x68] sm:$0xff] %vm386, 0.0
        %611 = vst.msk [vmem:[#allocation2 + $0x70] sm:$0x3] %vm598, 0.0
        %612 = vst.msk [vmem:[#allocation2 + $0x78] sm:$0xff] %vm386, 0.0
        %613 = vst.msk [vmem:[#allocation2 + $0x80] sm:$0xff] %vm386, 0.0
        %614 = vst.msk [vmem:[#allocation2 + $0x88] sm:$0x3] %vm598, 0.0
        %615 = vst.msk [vmem:[#allocation2 + $0x90] sm:$0xff] %vm386, 0.0
        %616 = vst.msk [vmem:[#allocation2 + $0x98] sm:$0xff] %vm386, 0.0
        %617 = vst.msk [vmem:[#allocation2 + $0xa0] sm:$0x3] %vm598, 0.0
        %618 = vst.msk [vmem:[#allocation2 + $0xa8] sm:$0xff] %vm386, 0.0
        %619 = vst.msk [vmem:[#allocation2 + $0xb0] sm:$0xff] %vm386, 0.0
        %620 = vst.msk [vmem:[#allocation2 + $0xb8] sm:$0x3] %vm598, 0.0
        %621 = vst.msk [vmem:[#allocation2 + $0xc0] sm:$0xff] %vm386, 0.0
        %622 = vst.msk [vmem:[#allocation2 + $0xc8] sm:$0xff] %vm386, 0.0
        %623 = vst.msk [vmem:[#allocation2 + $0xd0] sm:$0x3] %vm598, 0.0
        %624 = vst.msk [vmem:[#allocation2 + $0xd8] sm:$0xff] %vm386, 0.0
        %625 = vst.msk [vmem:[#allocation2 + $0xe0] sm:$0xff] %vm386, 0.0
        %626 = vst.msk [vmem:[#allocation2 + $0xe8] sm:$0x3] %vm598, 0.0
        %627 = vst.msk [vmem:[#allocation2 + $0xf0] sm:$0xff] %vm386, 0.0
        %628 = vst.msk [vmem:[#allocation2 + $0xf8] sm:$0xff] %vm386, 0.0
        %629 = vst.msk [vmem:[#allocation2 + $0x100] sm:$0x3] %vm598, 0.0
        %630 = vst.msk [vmem:[#allocation2 + $0x108] sm:$0xff] %vm386, 0.0
        %631 = vst.msk [vmem:[#allocation2 + $0x110] sm:$0xff] %vm386, 0.0
        %632 = vst.msk [vmem:[#allocation2 + $0x118] sm:$0x3] %vm598, 0.0
        %633 = vst.msk [vmem:[#allocation2 + $0x120] sm:$0xff] %vm386, 0.0
        %634 = vst.msk [vmem:[#allocation2 + $0x128] sm:$0xff] %vm386, 0.0
        %635 = vst.msk [vmem:[#allocation2 + $0x130] sm:$0x3] %vm598, 0.0
        %636 = vst.msk [vmem:[#allocation2 + $0x138] sm:$0xff] %vm386, 0.0
        %637 = vst.msk [vmem:[#allocation2 + $0x140] sm:$0xff] %vm386, 0.0
        %638 = vst.msk [vmem:[#allocation2 + $0x148] sm:$0x3] %vm598, 0.0
        %639 = vst.msk [vmem:[#allocation2 + $0x150] sm:$0xff] %vm386, 0.0
        %640 = vst.msk [vmem:[#allocation2 + $0x158] sm:$0xff] %vm386, 0.0
        %641 = vst.msk [vmem:[#allocation2 + $0x160] sm:$0x3] %vm598, 0.0
        %642 = vst.msk [vmem:[#allocation2 + $0x168] sm:$0xff] %vm386, 0.0
        %643 = vst.msk [vmem:[#allocation2 + $0x170] sm:$0xff] %vm386, 0.0
        %644 = vst.msk [vmem:[#allocation2 + $0x178] sm:$0x3] %vm598, 0.0
        %645 = vst.msk [vmem:[#allocation2 + $0x180] sm:$0xff] %vm386, 0.0
        %646 = vst.msk [vmem:[#allocation2 + $0x188] sm:$0xff] %vm386, 0.0
        %647 = vst.msk [vmem:[#allocation2 + $0x190] sm:$0x3] %vm598, 0.0
        %648 = vst.msk [vmem:[#allocation2 + $0x198] sm:$0xff] %vm386, 0.0
        %649 = vst.msk [vmem:[#allocation2 + $0x1a0] sm:$0xff] %vm386, 0.0
        %650 = vst.msk [vmem:[#allocation2 + $0x1a8] sm:$0x3] %vm598, 0.0
        %s651 = scalar_lea.vmem [#allocation2], 24
        %652 = vst.msk [vmem:[%s651 + $0x1] sm:$0xff] %vm386, %v470
        %653 = vst.msk [vmem:[%s651 + $0x9] sm:$0xff] %vm386, %v473
        %654 = vst.msk [vmem:[%s651 + $0x19] sm:$0xff] %vm386, %v478
        %655 = vst.msk [vmem:[%s651 + $0x21] sm:$0xff] %vm386, %v481
        %656 = vst.msk [vmem:[%s651 + $0x31] sm:$0xff] %vm386, %v486
        %657 = vst.msk [vmem:[%s651 + $0x39] sm:$0xff] %vm386, %v489
        %658 = vst.msk [vmem:[%s651 + $0x49] sm:$0xff] %vm386, %v494
        %659 = vst.msk [vmem:[%s651 + $0x51] sm:$0xff] %vm386, %v497
        %660 = vst.msk [vmem:[%s651 + $0x61] sm:$0xff] %vm386, %v502
        %661 = vst.msk [vmem:[%s651 + $0x69] sm:$0xff] %vm386, %v505
        %662 = vst.msk [vmem:[%s651 + $0x79] sm:$0xff] %vm386, %v510
        %663 = vst.msk [vmem:[%s651 + $0x81] sm:$0xff] %vm386, %v513
        %664 = vst.msk [vmem:[%s651 + $0x91] sm:$0xff] %vm386, %v518
        %665 = vst.msk [vmem:[%s651 + $0x99] sm:$0xff] %vm386, %v521
        %666 = vst.msk [vmem:[%s651 + $0xa9] sm:$0xff] %vm386, %v526
        %667 = vst.msk [vmem:[%s651 + $0xb1] sm:$0xff] %vm386, %v529
        %668 = vst.msk [vmem:[%s651 + $0xc1] sm:$0xff] %vm386, %v534
        %669 = vst.msk [vmem:[%s651 + $0xc9] sm:$0xff] %vm386, %v537
        %670 = vst.msk [vmem:[%s651 + $0xd9] sm:$0xff] %vm386, %v542
        %671 = vst.msk [vmem:[%s651 + $0xe1] sm:$0xff] %vm386, %v545
        %672 = vst.msk [vmem:[%s651 + $0xf1] sm:$0xff] %vm386, %v550
        %673 = vst.msk [vmem:[%s651 + $0xf9] sm:$0xff] %vm386, %v553
        %674 = vst.msk [vmem:[%s651 + $0x109] sm:$0xff] %vm386, %v558
        %675 = vst.msk [vmem:[%s651 + $0x111] sm:$0xff] %vm386, %v561
        %676 = vst.msk [vmem:[%s651 + $0x121] sm:$0xff] %vm386, %v566
        %677 = vst.msk [vmem:[%s651 + $0x129] sm:$0xff] %vm386, %v569
        %678 = vst.msk [vmem:[%s651 + $0x139] sm:$0xff] %vm386, %v574
        %679 = vst.msk [vmem:[%s651 + $0x141] sm:$0xff] %vm386, %v577
        %680 = vst.msk [vmem:[%s651 + $0x151] sm:$0xff] %vm386, %v582
        %681 = vst.msk [vmem:[%s651 + $0x159] sm:$0xff] %vm386, %v585
        %682 = vst.msk [vmem:[%s651 + $0x169] sm:$0xff] %vm386, %v590
        %683 = vst.msk [vmem:[%s651 + $0x171] sm:$0xff] %vm386, %v593
        %v684 = vld [vmem:[#allocation2] sm:$0xff]
        %v685 = vld [vmem:[#allocation2 + $0x8] sm:$0xff]
        %v686 = vld [vmem:[#allocation2 + $0x10] sm:$0x3]
        %v687 = vld [vmem:[#allocation2 + $0x18] sm:$0xff]
        %v688 = vld [vmem:[#allocation2 + $0x20] sm:$0xff]
        %v689 = vld [vmem:[#allocation2 + $0x28] sm:$0x3]
        %v690 = vld [vmem:[#allocation2 + $0x30] sm:$0xff]
        %v691 = vld [vmem:[#allocation2 + $0x38] sm:$0xff]
        %v692 = vld [vmem:[#allocation2 + $0x40] sm:$0x3]
        %v693 = vld [vmem:[#allocation2 + $0x48] sm:$0xff]
        %v694 = vld [vmem:[#allocation2 + $0x50] sm:$0xff]
        %v695 = vld [vmem:[#allocation2 + $0x58] sm:$0x3]
        %v696 = vld [vmem:[#allocation2 + $0x60] sm:$0xff]
        %v697 = vld [vmem:[#allocation2 + $0x68] sm:$0xff]
        %v698 = vld [vmem:[#allocation2 + $0x70] sm:$0x3]
        %v699 = vld [vmem:[#allocation2 + $0x78] sm:$0xff]
        %v700 = vld [vmem:[#allocation2 + $0x80] sm:$0xff]
        %v701 = vld [vmem:[#allocation2 + $0x88] sm:$0x3]
        %v702 = vld [vmem:[#allocation2 + $0x90] sm:$0xff]
        %v703 = vld [vmem:[#allocation2 + $0x98] sm:$0xff]
        %v704 = vld [vmem:[#allocation2 + $0xa0] sm:$0x3]
        %v705 = vld [vmem:[#allocation2 + $0xa8] sm:$0xff]
        %v706 = vld [vmem:[#allocation2 + $0xb0] sm:$0xff]
        %v707 = vld [vmem:[#allocation2 + $0xb8] sm:$0x3]
        %v708 = vld [vmem:[#allocation2 + $0xc0] sm:$0xff]
        %v709 = vld [vmem:[#allocation2 + $0xc8] sm:$0xff]
        %v710 = vld [vmem:[#allocation2 + $0xd0] sm:$0x3]
        %v711 = vld [vmem:[#allocation2 + $0xd8] sm:$0xff]
        %v712 = vld [vmem:[#allocation2 + $0xe0] sm:$0xff]
        %v713 = vld [vmem:[#allocation2 + $0xe8] sm:$0x3]
        %v714 = vld [vmem:[#allocation2 + $0xf0] sm:$0xff]
        %v715 = vld [vmem:[#allocation2 + $0xf8] sm:$0xff]
        %v716 = vld [vmem:[#allocation2 + $0x100] sm:$0x3]
        %v717 = vld [vmem:[#allocation2 + $0x108] sm:$0xff]
        %v718 = vld [vmem:[#allocation2 + $0x110] sm:$0xff]
        %v719 = vld [vmem:[#allocation2 + $0x118] sm:$0x3]
        %v720 = vld [vmem:[#allocation2 + $0x120] sm:$0xff]
        %v721 = vld [vmem:[#allocation2 + $0x128] sm:$0xff]
        %v722 = vld [vmem:[#allocation2 + $0x130] sm:$0x3]
        %v723 = vld [vmem:[#allocation2 + $0x138] sm:$0xff]
        %v724 = vld [vmem:[#allocation2 + $0x140] sm:$0xff]
        %v725 = vld [vmem:[#allocation2 + $0x148] sm:$0x3]
        %v726 = vld [vmem:[#allocation2 + $0x150] sm:$0xff]
        %v727 = vld [vmem:[#allocation2 + $0x158] sm:$0xff]
        %v728 = vld [vmem:[#allocation2 + $0x160] sm:$0x3]
        %v729 = vld [vmem:[#allocation2 + $0x168] sm:$0xff]
        %v730 = vld [vmem:[#allocation2 + $0x170] sm:$0xff]
        %v731 = vld [vmem:[#allocation2 + $0x178] sm:$0x3]
        %v732 = vld [vmem:[#allocation2 + $0x180] sm:$0xff]
        %v733 = vld [vmem:[#allocation2 + $0x188] sm:$0xff]
        %v734 = vld [vmem:[#allocation2 + $0x190] sm:$0x3]
        %v735 = vld [vmem:[#allocation2 + $0x198] sm:$0xff]
        %v736 = vld [vmem:[#allocation2 + $0x1a0] sm:$0xff]
        %v737 = vld [vmem:[#allocation2 + $0x1a8] sm:$0x3]
        %v738 = vld [vmem:[%s3] sm:$0x7]
        %v739 = vld [vmem:[%s3 + $0x4] sm:$0x7]
        %v740 = vld [vmem:[%s3 + $0x8] sm:$0x7]
        %v741 = vlaneseq
        %v742 = vshrl.u32 %v741, 7
        %v743 = vsub.s32 0, %v742
        %v744 = vrot.slane %v738, %v743
        %v745 = vmul.f32 %v684, %v744
        %v746 = vmul.f32 %v685, %v744
        %v747 = vmul.f32 %v687, %v744
        %v748 = vmul.f32 %v688, %v744
        %v749 = vmul.f32 %v690, %v744
        %v750 = vmul.f32 %v691, %v744
        %v751 = vmul.f32 %v693, %v744
        %v752 = vmul.f32 %v694, %v744
        %v753 = vmul.f32 %v696, %v744
        %v754 = vmul.f32 %v697, %v744
        %v755 = vmul.f32 %v699, %v744
        %v756 = vmul.f32 %v700, %v744
        %v757 = vmul.f32 %v702, %v744
        %v758 = vmul.f32 %v703, %v744
        %v759 = vmul.f32 %v705, %v744
        %v760 = vmul.f32 %v706, %v744
        %v761 = vmul.f32 %v708, %v744
        %v762 = vmul.f32 %v709, %v744
        %v763 = vmul.f32 %v711, %v744
        %v764 = vmul.f32 %v712, %v744
        %v765 = vmul.f32 %v714, %v744
        %v766 = vmul.f32 %v715, %v744
        %v767 = vmul.f32 %v717, %v744
        %v768 = vmul.f32 %v718, %v744
        %v769 = vmul.f32 %v720, %v744
        %v770 = vmul.f32 %v721, %v744
        %v771 = vmul.f32 %v723, %v744
        %v772 = vmul.f32 %v724, %v744
        %v773 = vmul.f32 %v726, %v744
        %v774 = vmul.f32 %v727, %v744
        %v775 = vmul.f32 %v729, %v744
        %v776 = vmul.f32 %v730, %v744
        %v777 = vadd.f32 %v745, 0.0
        %v778 = vadd.f32 %v746, 0.0
        %v779 = vadd.f32 %v747, 0.0
        %v780 = vadd.f32 %v748, 0.0
        %v781 = vadd.f32 %v749, 0.0
        %v782 = vadd.f32 %v750, 0.0
        %v783 = vadd.f32 %v751, 0.0
        %v784 = vadd.f32 %v752, 0.0
        %v785 = vadd.f32 %v753, 0.0
        %v786 = vadd.f32 %v754, 0.0
        %v787 = vadd.f32 %v755, 0.0
        %v788 = vadd.f32 %v756, 0.0
        %v789 = vadd.f32 %v757, 0.0
        %v790 = vadd.f32 %v758, 0.0
        %v791 = vadd.f32 %v759, 0.0
        %v792 = vadd.f32 %v760, 0.0
        %v793 = vadd.f32 %v761, 0.0
        %v794 = vadd.f32 %v762, 0.0
        %v795 = vadd.f32 %v763, 0.0
        %v796 = vadd.f32 %v764, 0.0
        %v797 = vadd.f32 %v765, 0.0
        %v798 = vadd.f32 %v766, 0.0
        %v799 = vadd.f32 %v767, 0.0
        %v800 = vadd.f32 %v768, 0.0
        %v801 = vadd.f32 %v769, 0.0
        %v802 = vadd.f32 %v770, 0.0
        %v803 = vadd.f32 %v771, 0.0
        %v804 = vadd.f32 %v772, 0.0
        %v805 = vadd.f32 %v773, 0.0
        %v806 = vadd.f32 %v774, 0.0
        %v807 = vadd.f32 %v775, 0.0
        %v808 = vadd.f32 %v776, 0.0
        %v809 = vlaneseq
        %v810 = vshrl.u32 %v809, 7
        %v811 = vsub.s32 1, %v810
        %v812 = vrot.slane %v738, %v811
        %v813 = vmul.f32 %v684, %v812
        %v814 = vmul.f32 %v685, %v812
        %v815 = vmul.f32 %v686, %v812
        %v816 = vmul.f32 %v687, %v812
        %v817 = vmul.f32 %v688, %v812
        %v818 = vmul.f32 %v689, %v812
        %v819 = vmul.f32 %v690, %v812
        %v820 = vmul.f32 %v691, %v812
        %v821 = vmul.f32 %v692, %v812
        %v822 = vmul.f32 %v693, %v812
        %v823 = vmul.f32 %v694, %v812
        %v824 = vmul.f32 %v695, %v812
        %v825 = vmul.f32 %v696, %v812
        %v826 = vmul.f32 %v697, %v812
        %v827 = vmul.f32 %v698, %v812
        %v828 = vmul.f32 %v699, %v812
        %v829 = vmul.f32 %v700, %v812
        %v830 = vmul.f32 %v701, %v812
        %v831 = vmul.f32 %v702, %v812
        %v832 = vmul.f32 %v703, %v812
        %v833 = vmul.f32 %v704, %v812
        %v834 = vmul.f32 %v705, %v812
        %v835 = vmul.f32 %v706, %v812
        %v836 = vmul.f32 %v707, %v812
        %v837 = vmul.f32 %v708, %v812
        %v838 = vmul.f32 %v709, %v812
        %v839 = vmul.f32 %v710, %v812
        %v840 = vmul.f32 %v711, %v812
        %v841 = vmul.f32 %v712, %v812
        %v842 = vmul.f32 %v713, %v812
        %v843 = vmul.f32 %v714, %v812
        %v844 = vmul.f32 %v715, %v812
        %v845 = vmul.f32 %v716, %v812
        %v846 = vmul.f32 %v717, %v812
        %v847 = vmul.f32 %v718, %v812
        %v848 = vmul.f32 %v719, %v812
        %v849 = vmul.f32 %v720, %v812
        %v850 = vmul.f32 %v721, %v812
        %v851 = vmul.f32 %v722, %v812
        %v852 = vmul.f32 %v723, %v812
        %v853 = vmul.f32 %v724, %v812
        %v854 = vmul.f32 %v725, %v812
        %v855 = vmul.f32 %v726, %v812
        %v856 = vmul.f32 %v727, %v812
        %v857 = vmul.f32 %v728, %v812
        %v858 = vmul.f32 %v729, %v812
        %v859 = vmul.f32 %v730, %v812
        %v860 = vmul.f32 %v731, %v812
        %vm909 = vcmask 1046528
        %v910 = vrot.slane %v813, 1
        %v911 = vrot.slane %v814, 1
        %v912 = vsel %vm909, %v910, %v911
        %v913 = vrot.slane %v815, 1
        %v914 = vsel %vm909, %v911, %v913
        %v915 = vrot.slane %v816, 1
        %v916 = vrot.slane %v817, 1
        %v917 = vsel %vm909, %v915, %v916
        %v918 = vrot.slane %v818, 1
        %v919 = vsel %vm909, %v916, %v918
        %v920 = vrot.slane %v819, 1
        %v921 = vrot.slane %v820, 1
        %v922 = vsel %vm909, %v920, %v921
        %v923 = vrot.slane %v821, 1
        %v924 = vsel %vm909, %v921, %v923
        %v925 = vrot.slane %v822, 1
        %v926 = vrot.slane %v823, 1
        %v927 = vsel %vm909, %v925, %v926
        %v928 = vrot.slane %v824, 1
        %v929 = vsel %vm909, %v926, %v928
        %v930 = vrot.slane %v825, 1
        %v931 = vrot.slane %v826, 1
        %v932 = vsel %vm909, %v930, %v931
        %v933 = vrot.slane %v827, 1
        %v934 = vsel %vm909, %v931, %v933
        %v935 = vrot.slane %v828, 1
        %v936 = vrot.slane %v829, 1
        %v937 = vsel %vm909, %v935, %v936
        %v938 = vrot.slane %v830, 1
        %v939 = vsel %vm909, %v936, %v938
        %v940 = vrot.slane %v831, 1
        %v941 = vrot.slane %v832, 1
        %v942 = vsel %vm909, %v940, %v941
        %v943 = vrot.slane %v833, 1
        %v944 = vsel %vm909, %v941, %v943
        %v945 = vrot.slane %v834, 1
        %v946 = vrot.slane %v835, 1
        %v947 = vsel %vm909, %v945, %v946
        %v948 = vrot.slane %v836, 1
        %v949 = vsel %vm909, %v946, %v948
        %v950 = vrot.slane %v837, 1
        %v951 = vrot.slane %v838, 1
        %v952 = vsel %vm909, %v950, %v951
        %v953 = vrot.slane %v839, 1
        %v954 = vsel %vm909, %v951, %v953
        %v955 = vrot.slane %v840, 1
        %v956 = vrot.slane %v841, 1
        %v957 = vsel %vm909, %v955, %v956
        %v958 = vrot.slane %v842, 1
        %v959 = vsel %vm909, %v956, %v958
        %v960 = vrot.slane %v843, 1
        %v961 = vrot.slane %v844, 1
        %v962 = vsel %vm909, %v960, %v961
        %v963 = vrot.slane %v845, 1
        %v964 = vsel %vm909, %v961, %v963
        %v965 = vrot.slane %v846, 1
        %v966 = vrot.slane %v847, 1
        %v967 = vsel %vm909, %v965, %v966
        %v968 = vrot.slane %v848, 1
        %v969 = vsel %vm909, %v966, %v968
        %v970 = vrot.slane %v849, 1
        %v971 = vrot.slane %v850, 1
        %v972 = vsel %vm909, %v970, %v971
        %v973 = vrot.slane %v851, 1
        %v974 = vsel %vm909, %v971, %v973
        %v975 = vrot.slane %v852, 1
        %v976 = vrot.slane %v853, 1
        %v977 = vsel %vm909, %v975, %v976
        %v978 = vrot.slane %v854, 1
        %v979 = vsel %vm909, %v976, %v978
        %v980 = vrot.slane %v855, 1
        %v981 = vrot.slane %v856, 1
        %v982 = vsel %vm909, %v980, %v981
        %v983 = vrot.slane %v857, 1
        %v984 = vsel %vm909, %v981, %v983
        %v985 = vrot.slane %v858, 1
        %v986 = vrot.slane %v859, 1
        %v987 = vsel %vm909, %v985, %v986
        %v988 = vrot.slane %v860, 1
        %v989 = vsel %vm909, %v986, %v988
        %v1022 = vadd.f32 %v777, %v912
        %v1023 = vadd.f32 %v778, %v914
        %v1024 = vadd.f32 %v779, %v917
        %v1025 = vadd.f32 %v780, %v919
        %v1026 = vadd.f32 %v781, %v922
        %v1027 = vadd.f32 %v782, %v924
        %v1028 = vadd.f32 %v783, %v927
        %v1029 = vadd.f32 %v784, %v929
        %v1030 = vadd.f32 %v785, %v932
        %v1031 = vadd.f32 %v786, %v934
        %v1032 = vadd.f32 %v787, %v937
        %v1033 = vadd.f32 %v788, %v939
        %v1034 = vadd.f32 %v789, %v942
        %v1035 = vadd.f32 %v790, %v944
        %v1036 = vadd.f32 %v791, %v947
        %v1037 = vadd.f32 %v792, %v949
        %v1038 = vadd.f32 %v793, %v952
        %v1039 = vadd.f32 %v794, %v954
        %v1040 = vadd.f32 %v795, %v957
        %v1041 = vadd.f32 %v796, %v959
        %v1042 = vadd.f32 %v797, %v962
        %v1043 = vadd.f32 %v798, %v964
        %v1044 = vadd.f32 %v799, %v967
        %v1045 = vadd.f32 %v800, %v969
        %v1046 = vadd.f32 %v801, %v972
        %v1047 = vadd.f32 %v802, %v974
        %v1048 = vadd.f32 %v803, %v977
        %v1049 = vadd.f32 %v804, %v979
        %v1050 = vadd.f32 %v805, %v982
        %v1051 = vadd.f32 %v806, %v984
        %v1052 = vadd.f32 %v807, %v987
        %v1053 = vadd.f32 %v808, %v989
        %v1054 = vlaneseq
        %v1055 = vshrl.u32 %v1054, 7
        %v1056 = vsub.s32 2, %v1055
        %v1057 = vrot.slane %v738, %v1056
        %v1058 = vmul.f32 %v684, %v1057
        %v1059 = vmul.f32 %v685, %v1057
        %v1060 = vmul.f32 %v686, %v1057
        %v1061 = vmul.f32 %v687, %v1057
        %v1062 = vmul.f32 %v688, %v1057
        %v1063 = vmul.f32 %v689, %v1057
        %v1064 = vmul.f32 %v690, %v1057
        %v1065 = vmul.f32 %v691, %v1057
        %v1066 = vmul.f32 %v692, %v1057
        %v1067 = vmul.f32 %v693, %v1057
        %v1068 = vmul.f32 %v694, %v1057
        %v1069 = vmul.f32 %v695, %v1057
        %v1070 = vmul.f32 %v696, %v1057
        %v1071 = vmul.f32 %v697, %v1057
        %v1072 = vmul.f32 %v698, %v1057
        %v1073 = vmul.f32 %v699, %v1057
        %v1074 = vmul.f32 %v700, %v1057
        %v1075 = vmul.f32 %v701, %v1057
        %v1076 = vmul.f32 %v702, %v1057
        %v1077 = vmul.f32 %v703, %v1057
        %v1078 = vmul.f32 %v704, %v1057
        %v1079 = vmul.f32 %v705, %v1057
        %v1080 = vmul.f32 %v706, %v1057
        %v1081 = vmul.f32 %v707, %v1057
        %v1082 = vmul.f32 %v708, %v1057
        %v1083 = vmul.f32 %v709, %v1057
        %v1084 = vmul.f32 %v710, %v1057
        %v1085 = vmul.f32 %v711, %v1057
        %v1086 = vmul.f32 %v712, %v1057
        %v1087 = vmul.f32 %v713, %v1057
        %v1088 = vmul.f32 %v714, %v1057
        %v1089 = vmul.f32 %v715, %v1057
        %v1090 = vmul.f32 %v716, %v1057
        %v1091 = vmul.f32 %v717, %v1057
        %v1092 = vmul.f32 %v718, %v1057
        %v1093 = vmul.f32 %v719, %v1057
        %v1094 = vmul.f32 %v720, %v1057
        %v1095 = vmul.f32 %v721, %v1057
        %v1096 = vmul.f32 %v722, %v1057
        %v1097 = vmul.f32 %v723, %v1057
        %v1098 = vmul.f32 %v724, %v1057
        %v1099 = vmul.f32 %v725, %v1057
        %v1100 = vmul.f32 %v726, %v1057
        %v1101 = vmul.f32 %v727, %v1057
        %v1102 = vmul.f32 %v728, %v1057
        %v1103 = vmul.f32 %v729, %v1057
        %v1104 = vmul.f32 %v730, %v1057
        %v1105 = vmul.f32 %v731, %v1057
        %vm1154 = vcmask 1045504
        %v1155 = vrot.slane %v1058, 2
        %v1156 = vrot.slane %v1059, 2
        %v1157 = vsel %vm1154, %v1155, %v1156
        %v1158 = vrot.slane %v1060, 2
        %v1159 = vsel %vm1154, %v1156, %v1158
        %v1160 = vrot.slane %v1061, 2
        %v1161 = vrot.slane %v1062, 2
        %v1162 = vsel %vm1154, %v1160, %v1161
        %v1163 = vrot.slane %v1063, 2
        %v1164 = vsel %vm1154, %v1161, %v1163
        %v1165 = vrot.slane %v1064, 2
        %v1166 = vrot.slane %v1065, 2
        %v1167 = vsel %vm1154, %v1165, %v1166
        %v1168 = vrot.slane %v1066, 2
        %v1169 = vsel %vm1154, %v1166, %v1168
        %v1170 = vrot.slane %v1067, 2
        %v1171 = vrot.slane %v1068, 2
        %v1172 = vsel %vm1154, %v1170, %v1171
        %v1173 = vrot.slane %v1069, 2
        %v1174 = vsel %vm1154, %v1171, %v1173
        %v1175 = vrot.slane %v1070, 2
        %v1176 = vrot.slane %v1071, 2
        %v1177 = vsel %vm1154, %v1175, %v1176
        %v1178 = vrot.slane %v1072, 2
        %v1179 = vsel %vm1154, %v1176, %v1178
        %v1180 = vrot.slane %v1073, 2
        %v1181 = vrot.slane %v1074, 2
        %v1182 = vsel %vm1154, %v1180, %v1181
        %v1183 = vrot.slane %v1075, 2
        %v1184 = vsel %vm1154, %v1181, %v1183
        %v1185 = vrot.slane %v1076, 2
        %v1186 = vrot.slane %v1077, 2
        %v1187 = vsel %vm1154, %v1185, %v1186
        %v1188 = vrot.slane %v1078, 2
        %v1189 = vsel %vm1154, %v1186, %v1188
        %v1190 = vrot.slane %v1079, 2
        %v1191 = vrot.slane %v1080, 2
        %v1192 = vsel %vm1154, %v1190, %v1191
        %v1193 = vrot.slane %v1081, 2
        %v1194 = vsel %vm1154, %v1191, %v1193
        %v1195 = vrot.slane %v1082, 2
        %v1196 = vrot.slane %v1083, 2
        %v1197 = vsel %vm1154, %v1195, %v1196
        %v1198 = vrot.slane %v1084, 2
        %v1199 = vsel %vm1154, %v1196, %v1198
        %v1200 = vrot.slane %v1085, 2
        %v1201 = vrot.slane %v1086, 2
        %v1202 = vsel %vm1154, %v1200, %v1201
        %v1203 = vrot.slane %v1087, 2
        %v1204 = vsel %vm1154, %v1201, %v1203
        %v1205 = vrot.slane %v1088, 2
        %v1206 = vrot.slane %v1089, 2
        %v1207 = vsel %vm1154, %v1205, %v1206
        %v1208 = vrot.slane %v1090, 2
        %v1209 = vsel %vm1154, %v1206, %v1208
        %v1210 = vrot.slane %v1091, 2
        %v1211 = vrot.slane %v1092, 2
        %v1212 = vsel %vm1154, %v1210, %v1211
        %v1213 = vrot.slane %v1093, 2
        %v1214 = vsel %vm1154, %v1211, %v1213
        %v1215 = vrot.slane %v1094, 2
        %v1216 = vrot.slane %v1095, 2
        %v1217 = vsel %vm1154, %v1215, %v1216
        %v1218 = vrot.slane %v1096, 2
        %v1219 = vsel %vm1154, %v1216, %v1218
        %v1220 = vrot.slane %v1097, 2
        %v1221 = vrot.slane %v1098, 2
        %v1222 = vsel %vm1154, %v1220, %v1221
        %v1223 = vrot.slane %v1099, 2
        %v1224 = vsel %vm1154, %v1221, %v1223
        %v1225 = vrot.slane %v1100, 2
        %v1226 = vrot.slane %v1101, 2
        %v1227 = vsel %vm1154, %v1225, %v1226
        %v1228 = vrot.slane %v1102, 2
        %v1229 = vsel %vm1154, %v1226, %v1228
        %v1230 = vrot.slane %v1103, 2
        %v1231 = vrot.slane %v1104, 2
        %v1232 = vsel %vm1154, %v1230, %v1231
        %v1233 = vrot.slane %v1105, 2
        %v1234 = vsel %vm1154, %v1231, %v1233
        %v1267 = vadd.f32 %v1022, %v1157
        %v1268 = vadd.f32 %v1023, %v1159
        %v1269 = vadd.f32 %v1024, %v1162
        %v1270 = vadd.f32 %v1025, %v1164
        %v1271 = vadd.f32 %v1026, %v1167
        %v1272 = vadd.f32 %v1027, %v1169
        %v1273 = vadd.f32 %v1028, %v1172
        %v1274 = vadd.f32 %v1029, %v1174
        %v1275 = vadd.f32 %v1030, %v1177
        %v1276 = vadd.f32 %v1031, %v1179
        %v1277 = vadd.f32 %v1032, %v1182
        %v1278 = vadd.f32 %v1033, %v1184
        %v1279 = vadd.f32 %v1034, %v1187
        %v1280 = vadd.f32 %v1035, %v1189
        %v1281 = vadd.f32 %v1036, %v1192
        %v1282 = vadd.f32 %v1037, %v1194
        %v1283 = vadd.f32 %v1038, %v1197
        %v1284 = vadd.f32 %v1039, %v1199
        %v1285 = vadd.f32 %v1040, %v1202
        %v1286 = vadd.f32 %v1041, %v1204
        %v1287 = vadd.f32 %v1042, %v1207
        %v1288 = vadd.f32 %v1043, %v1209
        %v1289 = vadd.f32 %v1044, %v1212
        %v1290 = vadd.f32 %v1045, %v1214
        %v1291 = vadd.f32 %v1046, %v1217
        %v1292 = vadd.f32 %v1047, %v1219
        %v1293 = vadd.f32 %v1048, %v1222
        %v1294 = vadd.f32 %v1049, %v1224
        %v1295 = vadd.f32 %v1050, %v1227
        %v1296 = vadd.f32 %v1051, %v1229
        %v1297 = vadd.f32 %v1052, %v1232
        %v1298 = vadd.f32 %v1053, %v1234
        %v1299 = vlaneseq
        %v1300 = vshrl.u32 %v1299, 7
        %v1301 = vsub.s32 0, %v1300
        %v1302 = vrot.slane %v739, %v1301
        %v1303 = vmul.f32 %v687, %v1302
        %v1304 = vmul.f32 %v688, %v1302
        %v1305 = vmul.f32 %v690, %v1302
        %v1306 = vmul.f32 %v691, %v1302
        %v1307 = vmul.f32 %v693, %v1302
        %v1308 = vmul.f32 %v694, %v1302
        %v1309 = vmul.f32 %v696, %v1302
        %v1310 = vmul.f32 %v697, %v1302
        %v1311 = vmul.f32 %v699, %v1302
        %v1312 = vmul.f32 %v700, %v1302
        %v1313 = vmul.f32 %v702, %v1302
        %v1314 = vmul.f32 %v703, %v1302
        %v1315 = vmul.f32 %v705, %v1302
        %v1316 = vmul.f32 %v706, %v1302
        %v1317 = vmul.f32 %v708, %v1302
        %v1318 = vmul.f32 %v709, %v1302
        %v1319 = vmul.f32 %v711, %v1302
        %v1320 = vmul.f32 %v712, %v1302
        %v1321 = vmul.f32 %v714, %v1302
        %v1322 = vmul.f32 %v715, %v1302
        %v1323 = vmul.f32 %v717, %v1302
        %v1324 = vmul.f32 %v718, %v1302
        %v1325 = vmul.f32 %v720, %v1302
        %v1326 = vmul.f32 %v721, %v1302
        %v1327 = vmul.f32 %v723, %v1302
        %v1328 = vmul.f32 %v724, %v1302
        %v1329 = vmul.f32 %v726, %v1302
        %v1330 = vmul.f32 %v727, %v1302
        %v1331 = vmul.f32 %v729, %v1302
        %v1332 = vmul.f32 %v730, %v1302
        %v1333 = vmul.f32 %v732, %v1302
        %v1334 = vmul.f32 %v733, %v1302
        %v1335 = vadd.f32 %v1267, %v1303
        %v1336 = vadd.f32 %v1268, %v1304
        %v1337 = vadd.f32 %v1269, %v1305
        %v1338 = vadd.f32 %v1270, %v1306
        %v1339 = vadd.f32 %v1271, %v1307
        %v1340 = vadd.f32 %v1272, %v1308
        %v1341 = vadd.f32 %v1273, %v1309
        %v1342 = vadd.f32 %v1274, %v1310
        %v1343 = vadd.f32 %v1275, %v1311
        %v1344 = vadd.f32 %v1276, %v1312
        %v1345 = vadd.f32 %v1277, %v1313
        %v1346 = vadd.f32 %v1278, %v1314
        %v1347 = vadd.f32 %v1279, %v1315
        %v1348 = vadd.f32 %v1280, %v1316
        %v1349 = vadd.f32 %v1281, %v1317
        %v1350 = vadd.f32 %v1282, %v1318
        %v1351 = vadd.f32 %v1283, %v1319
        %v1352 = vadd.f32 %v1284, %v1320
        %v1353 = vadd.f32 %v1285, %v1321
        %v1354 = vadd.f32 %v1286, %v1322
        %v1355 = vadd.f32 %v1287, %v1323
        %v1356 = vadd.f32 %v1288, %v1324
        %v1357 = vadd.f32 %v1289, %v1325
        %v1358 = vadd.f32 %v1290, %v1326
        %v1359 = vadd.f32 %v1291, %v1327
        %v1360 = vadd.f32 %v1292, %v1328
        %v1361 = vadd.f32 %v1293, %v1329
        %v1362 = vadd.f32 %v1294, %v1330
        %v1363 = vadd.f32 %v1295, %v1331
        %v1364 = vadd.f32 %v1296, %v1332
        %v1365 = vadd.f32 %v1297, %v1333
        %v1366 = vadd.f32 %v1298, %v1334
        %v1367 = vlaneseq
        %v1368 = vshrl.u32 %v1367, 7
        %v1369 = vsub.s32 1, %v1368
        %v1370 = vrot.slane %v739, %v1369
        %v1371 = vmul.f32 %v687, %v1370
        %v1372 = vmul.f32 %v688, %v1370
        %v1373 = vmul.f32 %v689, %v1370
        %v1374 = vmul.f32 %v690, %v1370
        %v1375 = vmul.f32 %v691, %v1370
        %v1376 = vmul.f32 %v692, %v1370
        %v1377 = vmul.f32 %v693, %v1370
        %v1378 = vmul.f32 %v694, %v1370
        %v1379 = vmul.f32 %v695, %v1370
        %v1380 = vmul.f32 %v696, %v1370
        %v1381 = vmul.f32 %v697, %v1370
        %v1382 = vmul.f32 %v698, %v1370
        %v1383 = vmul.f32 %v699, %v1370
        %v1384 = vmul.f32 %v700, %v1370
        %v1385 = vmul.f32 %v701, %v1370
        %v1386 = vmul.f32 %v702, %v1370
        %v1387 = vmul.f32 %v703, %v1370
        %v1388 = vmul.f32 %v704, %v1370
        %v1389 = vmul.f32 %v705, %v1370
        %v1390 = vmul.f32 %v706, %v1370
        %v1391 = vmul.f32 %v707, %v1370
        %v1392 = vmul.f32 %v708, %v1370
        %v1393 = vmul.f32 %v709, %v1370
        %v1394 = vmul.f32 %v710, %v1370
        %v1395 = vmul.f32 %v711, %v1370
        %v1396 = vmul.f32 %v712, %v1370
        %v1397 = vmul.f32 %v713, %v1370
        %v1398 = vmul.f32 %v714, %v1370
        %v1399 = vmul.f32 %v715, %v1370
        %v1400 = vmul.f32 %v716, %v1370
        %v1401 = vmul.f32 %v717, %v1370
        %v1402 = vmul.f32 %v718, %v1370
        %v1403 = vmul.f32 %v719, %v1370
        %v1404 = vmul.f32 %v720, %v1370
        %v1405 = vmul.f32 %v721, %v1370
        %v1406 = vmul.f32 %v722, %v1370
        %v1407 = vmul.f32 %v723, %v1370
        %v1408 = vmul.f32 %v724, %v1370
        %v1409 = vmul.f32 %v725, %v1370
        %v1410 = vmul.f32 %v726, %v1370
        %v1411 = vmul.f32 %v727, %v1370
        %v1412 = vmul.f32 %v728, %v1370
        %v1413 = vmul.f32 %v729, %v1370
        %v1414 = vmul.f32 %v730, %v1370
        %v1415 = vmul.f32 %v731, %v1370
        %v1416 = vmul.f32 %v732, %v1370
        %v1417 = vmul.f32 %v733, %v1370
        %v1418 = vmul.f32 %v734, %v1370
        %v1467 = vrot.slane %v1371, 1
        %v1468 = vrot.slane %v1372, 1
        %v1469 = vsel %vm909, %v1467, %v1468
        %v1470 = vrot.slane %v1373, 1
        %v1471 = vsel %vm909, %v1468, %v1470
        %v1472 = vrot.slane %v1374, 1
        %v1473 = vrot.slane %v1375, 1
        %v1474 = vsel %vm909, %v1472, %v1473
        %v1475 = vrot.slane %v1376, 1
        %v1476 = vsel %vm909, %v1473, %v1475
        %v1477 = vrot.slane %v1377, 1
        %v1478 = vrot.slane %v1378, 1
        %v1479 = vsel %vm909, %v1477, %v1478
        %v1480 = vrot.slane %v1379, 1
        %v1481 = vsel %vm909, %v1478, %v1480
        %v1482 = vrot.slane %v1380, 1
        %v1483 = vrot.slane %v1381, 1
        %v1484 = vsel %vm909, %v1482, %v1483
        %v1485 = vrot.slane %v1382, 1
        %v1486 = vsel %vm909, %v1483, %v1485
        %v1487 = vrot.slane %v1383, 1
        %v1488 = vrot.slane %v1384, 1
        %v1489 = vsel %vm909, %v1487, %v1488
        %v1490 = vrot.slane %v1385, 1
        %v1491 = vsel %vm909, %v1488, %v1490
        %v1492 = vrot.slane %v1386, 1
        %v1493 = vrot.slane %v1387, 1
        %v1494 = vsel %vm909, %v1492, %v1493
        %v1495 = vrot.slane %v1388, 1
        %v1496 = vsel %vm909, %v1493, %v1495
        %v1497 = vrot.slane %v1389, 1
        %v1498 = vrot.slane %v1390, 1
        %v1499 = vsel %vm909, %v1497, %v1498
        %v1500 = vrot.slane %v1391, 1
        %v1501 = vsel %vm909, %v1498, %v1500
        %v1502 = vrot.slane %v1392, 1
        %v1503 = vrot.slane %v1393, 1
        %v1504 = vsel %vm909, %v1502, %v1503
        %v1505 = vrot.slane %v1394, 1
        %v1506 = vsel %vm909, %v1503, %v1505
        %v1507 = vrot.slane %v1395, 1
        %v1508 = vrot.slane %v1396, 1
        %v1509 = vsel %vm909, %v1507, %v1508
        %v1510 = vrot.slane %v1397, 1
        %v1511 = vsel %vm909, %v1508, %v1510
        %v1512 = vrot.slane %v1398, 1
        %v1513 = vrot.slane %v1399, 1
        %v1514 = vsel %vm909, %v1512, %v1513
        %v1515 = vrot.slane %v1400, 1
        %v1516 = vsel %vm909, %v1513, %v1515
        %v1517 = vrot.slane %v1401, 1
        %v1518 = vrot.slane %v1402, 1
        %v1519 = vsel %vm909, %v1517, %v1518
        %v1520 = vrot.slane %v1403, 1
        %v1521 = vsel %vm909, %v1518, %v1520
        %v1522 = vrot.slane %v1404, 1
        %v1523 = vrot.slane %v1405, 1
        %v1524 = vsel %vm909, %v1522, %v1523
        %v1525 = vrot.slane %v1406, 1
        %v1526 = vsel %vm909, %v1523, %v1525
        %v1527 = vrot.slane %v1407, 1
        %v1528 = vrot.slane %v1408, 1
        %v1529 = vsel %vm909, %v1527, %v1528
        %v1530 = vrot.slane %v1409, 1
        %v1531 = vsel %vm909, %v1528, %v1530
        %v1532 = vrot.slane %v1410, 1
        %v1533 = vrot.slane %v1411, 1
        %v1534 = vsel %vm909, %v1532, %v1533
        %v1535 = vrot.slane %v1412, 1
        %v1536 = vsel %vm909, %v1533, %v1535
        %v1537 = vrot.slane %v1413, 1
        %v1538 = vrot.slane %v1414, 1
        %v1539 = vsel %vm909, %v1537, %v1538
        %v1540 = vrot.slane %v1415, 1
        %v1541 = vsel %vm909, %v1538, %v1540
        %v1542 = vrot.slane %v1416, 1
        %v1543 = vrot.slane %v1417, 1
        %v1544 = vsel %vm909, %v1542, %v1543
        %v1545 = vrot.slane %v1418, 1
        %v1546 = vsel %vm909, %v1543, %v1545
        %v1579 = vadd.f32 %v1335, %v1469
        %v1580 = vadd.f32 %v1336, %v1471
        %v1581 = vadd.f32 %v1337, %v1474
        %v1582 = vadd.f32 %v1338, %v1476
        %v1583 = vadd.f32 %v1339, %v1479
        %v1584 = vadd.f32 %v1340, %v1481
        %v1585 = vadd.f32 %v1341, %v1484
        %v1586 = vadd.f32 %v1342, %v1486
        %v1587 = vadd.f32 %v1343, %v1489
        %v1588 = vadd.f32 %v1344, %v1491
        %v1589 = vadd.f32 %v1345, %v1494
        %v1590 = vadd.f32 %v1346, %v1496
        %v1591 = vadd.f32 %v1347, %v1499
        %v1592 = vadd.f32 %v1348, %v1501
        %v1593 = vadd.f32 %v1349, %v1504
        %v1594 = vadd.f32 %v1350, %v1506
        %v1595 = vadd.f32 %v1351, %v1509
        %v1596 = vadd.f32 %v1352, %v1511
        %v1597 = vadd.f32 %v1353, %v1514
        %v1598 = vadd.f32 %v1354, %v1516
        %v1599 = vadd.f32 %v1355, %v1519
        %v1600 = vadd.f32 %v1356, %v1521
        %v1601 = vadd.f32 %v1357, %v1524
        %v1602 = vadd.f32 %v1358, %v1526
        %v1603 = vadd.f32 %v1359, %v1529
        %v1604 = vadd.f32 %v1360, %v1531
        %v1605 = vadd.f32 %v1361, %v1534
        %v1606 = vadd.f32 %v1362, %v1536
        %v1607 = vadd.f32 %v1363, %v1539
        %v1608 = vadd.f32 %v1364, %v1541
        %v1609 = vadd.f32 %v1365, %v1544
        %v1610 = vadd.f32 %v1366, %v1546
        %v1611 = vlaneseq
        %v1612 = vshrl.u32 %v1611, 7
        %v1613 = vsub.s32 2, %v1612
        %v1614 = vrot.slane %v739, %v1613
        %v1615 = vmul.f32 %v687, %v1614
        %v1616 = vmul.f32 %v688, %v1614
        %v1617 = vmul.f32 %v689, %v1614
        %v1618 = vmul.f32 %v690, %v1614
        %v1619 = vmul.f32 %v691, %v1614
        %v1620 = vmul.f32 %v692, %v1614
        %v1621 = vmul.f32 %v693, %v1614
        %v1622 = vmul.f32 %v694, %v1614
        %v1623 = vmul.f32 %v695, %v1614
        %v1624 = vmul.f32 %v696, %v1614
        %v1625 = vmul.f32 %v697, %v1614
        %v1626 = vmul.f32 %v698, %v1614
        %v1627 = vmul.f32 %v699, %v1614
        %v1628 = vmul.f32 %v700, %v1614
        %v1629 = vmul.f32 %v701, %v1614
        %v1630 = vmul.f32 %v702, %v1614
        %v1631 = vmul.f32 %v703, %v1614
        %v1632 = vmul.f32 %v704, %v1614
        %v1633 = vmul.f32 %v705, %v1614
        %v1634 = vmul.f32 %v706, %v1614
        %v1635 = vmul.f32 %v707, %v1614
        %v1636 = vmul.f32 %v708, %v1614
        %v1637 = vmul.f32 %v709, %v1614
        %v1638 = vmul.f32 %v710, %v1614
        %v1639 = vmul.f32 %v711, %v1614
        %v1640 = vmul.f32 %v712, %v1614
        %v1641 = vmul.f32 %v713, %v1614
        %v1642 = vmul.f32 %v714, %v1614
        %v1643 = vmul.f32 %v715, %v1614
        %v1644 = vmul.f32 %v716, %v1614
        %v1645 = vmul.f32 %v717, %v1614
        %v1646 = vmul.f32 %v718, %v1614
        %v1647 = vmul.f32 %v719, %v1614
        %v1648 = vmul.f32 %v720, %v1614
        %v1649 = vmul.f32 %v721, %v1614
        %v1650 = vmul.f32 %v722, %v1614
        %v1651 = vmul.f32 %v723, %v1614
        %v1652 = vmul.f32 %v724, %v1614
        %v1653 = vmul.f32 %v725, %v1614
        %v1654 = vmul.f32 %v726, %v1614
        %v1655 = vmul.f32 %v727, %v1614
        %v1656 = vmul.f32 %v728, %v1614
        %v1657 = vmul.f32 %v729, %v1614
        %v1658 = vmul.f32 %v730, %v1614
        %v1659 = vmul.f32 %v731, %v1614
        %v1660 = vmul.f32 %v732, %v1614
        %v1661 = vmul.f32 %v733, %v1614
        %v1662 = vmul.f32 %v734, %v1614
        %v1711 = vrot.slane %v1615, 2
        %v1712 = vrot.slane %v1616, 2
        %v1713 = vsel %vm1154, %v1711, %v1712
        %v1714 = vrot.slane %v1617, 2
        %v1715 = vsel %vm1154, %v1712, %v1714
        %v1716 = vrot.slane %v1618, 2
        %v1717 = vrot.slane %v1619, 2
        %v1718 = vsel %vm1154, %v1716, %v1717
        %v1719 = vrot.slane %v1620, 2
        %v1720 = vsel %vm1154, %v1717, %v1719
        %v1721 = vrot.slane %v1621, 2
        %v1722 = vrot.slane %v1622, 2
        %v1723 = vsel %vm1154, %v1721, %v1722
        %v1724 = vrot.slane %v1623, 2
        %v1725 = vsel %vm1154, %v1722, %v1724
        %v1726 = vrot.slane %v1624, 2
        %v1727 = vrot.slane %v1625, 2
        %v1728 = vsel %vm1154, %v1726, %v1727
        %v1729 = vrot.slane %v1626, 2
        %v1730 = vsel %vm1154, %v1727, %v1729
        %v1731 = vrot.slane %v1627, 2
        %v1732 = vrot.slane %v1628, 2
        %v1733 = vsel %vm1154, %v1731, %v1732
        %v1734 = vrot.slane %v1629, 2
        %v1735 = vsel %vm1154, %v1732, %v1734
        %v1736 = vrot.slane %v1630, 2
        %v1737 = vrot.slane %v1631, 2
        %v1738 = vsel %vm1154, %v1736, %v1737
        %v1739 = vrot.slane %v1632, 2
        %v1740 = vsel %vm1154, %v1737, %v1739
        %v1741 = vrot.slane %v1633, 2
        %v1742 = vrot.slane %v1634, 2
        %v1743 = vsel %vm1154, %v1741, %v1742
        %v1744 = vrot.slane %v1635, 2
        %v1745 = vsel %vm1154, %v1742, %v1744
        %v1746 = vrot.slane %v1636, 2
        %v1747 = vrot.slane %v1637, 2
        %v1748 = vsel %vm1154, %v1746, %v1747
        %v1749 = vrot.slane %v1638, 2
        %v1750 = vsel %vm1154, %v1747, %v1749
        %v1751 = vrot.slane %v1639, 2
        %v1752 = vrot.slane %v1640, 2
        %v1753 = vsel %vm1154, %v1751, %v1752
        %v1754 = vrot.slane %v1641, 2
        %v1755 = vsel %vm1154, %v1752, %v1754
        %v1756 = vrot.slane %v1642, 2
        %v1757 = vrot.slane %v1643, 2
        %v1758 = vsel %vm1154, %v1756, %v1757
        %v1759 = vrot.slane %v1644, 2
        %v1760 = vsel %vm1154, %v1757, %v1759
        %v1761 = vrot.slane %v1645, 2
        %v1762 = vrot.slane %v1646, 2
        %v1763 = vsel %vm1154, %v1761, %v1762
        %v1764 = vrot.slane %v1647, 2
        %v1765 = vsel %vm1154, %v1762, %v1764
        %v1766 = vrot.slane %v1648, 2
        %v1767 = vrot.slane %v1649, 2
        %v1768 = vsel %vm1154, %v1766, %v1767
        %v1769 = vrot.slane %v1650, 2
        %v1770 = vsel %vm1154, %v1767, %v1769
        %v1771 = vrot.slane %v1651, 2
        %v1772 = vrot.slane %v1652, 2
        %v1773 = vsel %vm1154, %v1771, %v1772
        %v1774 = vrot.slane %v1653, 2
        %v1775 = vsel %vm1154, %v1772, %v1774
        %v1776 = vrot.slane %v1654, 2
        %v1777 = vrot.slane %v1655, 2
        %v1778 = vsel %vm1154, %v1776, %v1777
        %v1779 = vrot.slane %v1656, 2
        %v1780 = vsel %vm1154, %v1777, %v1779
        %v1781 = vrot.slane %v1657, 2
        %v1782 = vrot.slane %v1658, 2
        %v1783 = vsel %vm1154, %v1781, %v1782
        %v1784 = vrot.slane %v1659, 2
        %v1785 = vsel %vm1154, %v1782, %v1784
        %v1786 = vrot.slane %v1660, 2
        %v1787 = vrot.slane %v1661, 2
        %v1788 = vsel %vm1154, %v1786, %v1787
        %v1789 = vrot.slane %v1662, 2
        %v1790 = vsel %vm1154, %v1787, %v1789
        %v1823 = vadd.f32 %v1579, %v1713
        %v1824 = vadd.f32 %v1580, %v1715
        %v1825 = vadd.f32 %v1581, %v1718
        %v1826 = vadd.f32 %v1582, %v1720
        %v1827 = vadd.f32 %v1583, %v1723
        %v1828 = vadd.f32 %v1584, %v1725
        %v1829 = vadd.f32 %v1585, %v1728
        %v1830 = vadd.f32 %v1586, %v1730
        %v1831 = vadd.f32 %v1587, %v1733
        %v1832 = vadd.f32 %v1588, %v1735
        %v1833 = vadd.f32 %v1589, %v1738
        %v1834 = vadd.f32 %v1590, %v1740
        %v1835 = vadd.f32 %v1591, %v1743
        %v1836 = vadd.f32 %v1592, %v1745
        %v1837 = vadd.f32 %v1593, %v1748
        %v1838 = vadd.f32 %v1594, %v1750
        %v1839 = vadd.f32 %v1595, %v1753
        %v1840 = vadd.f32 %v1596, %v1755
        %v1841 = vadd.f32 %v1597, %v1758
        %v1842 = vadd.f32 %v1598, %v1760
        %v1843 = vadd.f32 %v1599, %v1763
        %v1844 = vadd.f32 %v1600, %v1765
        %v1845 = vadd.f32 %v1601, %v1768
        %v1846 = vadd.f32 %v1602, %v1770
        %v1847 = vadd.f32 %v1603, %v1773
        %v1848 = vadd.f32 %v1604, %v1775
        %v1849 = vadd.f32 %v1605, %v1778
        %v1850 = vadd.f32 %v1606, %v1780
        %v1851 = vadd.f32 %v1607, %v1783
        %v1852 = vadd.f32 %v1608, %v1785
        %v1853 = vadd.f32 %v1609, %v1788
        %v1854 = vadd.f32 %v1610, %v1790
        %v1855 = vlaneseq
        %v1856 = vshrl.u32 %v1855, 7
        %v1857 = vsub.s32 0, %v1856
        %v1858 = vrot.slane %v740, %v1857
        %v1859 = vmul.f32 %v690, %v1858
        %v1860 = vmul.f32 %v691, %v1858
        %v1861 = vmul.f32 %v693, %v1858
        %v1862 = vmul.f32 %v694, %v1858
        %v1863 = vmul.f32 %v696, %v1858
        %v1864 = vmul.f32 %v697, %v1858
        %v1865 = vmul.f32 %v699, %v1858
        %v1866 = vmul.f32 %v700, %v1858
        %v1867 = vmul.f32 %v702, %v1858
        %v1868 = vmul.f32 %v703, %v1858
        %v1869 = vmul.f32 %v705, %v1858
        %v1870 = vmul.f32 %v706, %v1858
        %v1871 = vmul.f32 %v708, %v1858
        %v1872 = vmul.f32 %v709, %v1858
        %v1873 = vmul.f32 %v711, %v1858
        %v1874 = vmul.f32 %v712, %v1858
        %v1875 = vmul.f32 %v714, %v1858
        %v1876 = vmul.f32 %v715, %v1858
        %v1877 = vmul.f32 %v717, %v1858
        %v1878 = vmul.f32 %v718, %v1858
        %v1879 = vmul.f32 %v720, %v1858
        %v1880 = vmul.f32 %v721, %v1858
        %v1881 = vmul.f32 %v723, %v1858
        %v1882 = vmul.f32 %v724, %v1858
        %v1883 = vmul.f32 %v726, %v1858
        %v1884 = vmul.f32 %v727, %v1858
        %v1885 = vmul.f32 %v729, %v1858
        %v1886 = vmul.f32 %v730, %v1858
        %v1887 = vmul.f32 %v732, %v1858
        %v1888 = vmul.f32 %v733, %v1858
        %v1889 = vmul.f32 %v735, %v1858
        %v1890 = vmul.f32 %v736, %v1858
        %v1891 = vadd.f32 %v1823, %v1859
        %v1892 = vadd.f32 %v1824, %v1860
        %v1893 = vadd.f32 %v1825, %v1861
        %v1894 = vadd.f32 %v1826, %v1862
        %v1895 = vadd.f32 %v1827, %v1863
        %v1896 = vadd.f32 %v1828, %v1864
        %v1897 = vadd.f32 %v1829, %v1865
        %v1898 = vadd.f32 %v1830, %v1866
        %v1899 = vadd.f32 %v1831, %v1867
        %v1900 = vadd.f32 %v1832, %v1868
        %v1901 = vadd.f32 %v1833, %v1869
        %v1902 = vadd.f32 %v1834, %v1870
        %v1903 = vadd.f32 %v1835, %v1871
        %v1904 = vadd.f32 %v1836, %v1872
        %v1905 = vadd.f32 %v1837, %v1873
        %v1906 = vadd.f32 %v1838, %v1874
        %v1907 = vadd.f32 %v1839, %v1875
        %v1908 = vadd.f32 %v1840, %v1876
        %v1909 = vadd.f32 %v1841, %v1877
        %v1910 = vadd.f32 %v1842, %v1878
        %v1911 = vadd.f32 %v1843, %v1879
        %v1912 = vadd.f32 %v1844, %v1880
        %v1913 = vadd.f32 %v1845, %v1881
        %v1914 = vadd.f32 %v1846, %v1882
        %v1915 = vadd.f32 %v1847, %v1883
        %v1916 = vadd.f32 %v1848, %v1884
        %v1917 = vadd.f32 %v1849, %v1885
        %v1918 = vadd.f32 %v1850, %v1886
        %v1919 = vadd.f32 %v1851, %v1887
        %v1920 = vadd.f32 %v1852, %v1888
        %v1921 = vadd.f32 %v1853, %v1889
        %v1922 = vadd.f32 %v1854, %v1890
        %v1923 = vlaneseq
        %v1924 = vshrl.u32 %v1923, 7
        %v1925 = vsub.s32 1, %v1924
        %v1926 = vrot.slane %v740, %v1925
        %v1927 = vmul.f32 %v690, %v1926
        %v1928 = vmul.f32 %v691, %v1926
        %v1929 = vmul.f32 %v692, %v1926
        %v1930 = vmul.f32 %v693, %v1926
        %v1931 = vmul.f32 %v694, %v1926
        %v1932 = vmul.f32 %v695, %v1926
        %v1933 = vmul.f32 %v696, %v1926
        %v1934 = vmul.f32 %v697, %v1926
        %v1935 = vmul.f32 %v698, %v1926
        %v1936 = vmul.f32 %v699, %v1926
        %v1937 = vmul.f32 %v700, %v1926
        %v1938 = vmul.f32 %v701, %v1926
        %v1939 = vmul.f32 %v702, %v1926
        %v1940 = vmul.f32 %v703, %v1926
        %v1941 = vmul.f32 %v704, %v1926
        %v1942 = vmul.f32 %v705, %v1926
        %v1943 = vmul.f32 %v706, %v1926
        %v1944 = vmul.f32 %v707, %v1926
        %v1945 = vmul.f32 %v708, %v1926
        %v1946 = vmul.f32 %v709, %v1926
        %v1947 = vmul.f32 %v710, %v1926
        %v1948 = vmul.f32 %v711, %v1926
        %v1949 = vmul.f32 %v712, %v1926
        %v1950 = vmul.f32 %v713, %v1926
        %v1951 = vmul.f32 %v714, %v1926
        %v1952 = vmul.f32 %v715, %v1926
        %v1953 = vmul.f32 %v716, %v1926
        %v1954 = vmul.f32 %v717, %v1926
        %v1955 = vmul.f32 %v718, %v1926
        %v1956 = vmul.f32 %v719, %v1926
        %v1957 = vmul.f32 %v720, %v1926
        %v1958 = vmul.f32 %v721, %v1926
        %v1959 = vmul.f32 %v722, %v1926
        %v1960 = vmul.f32 %v723, %v1926
        %v1961 = vmul.f32 %v724, %v1926
        %v1962 = vmul.f32 %v725, %v1926
        %v1963 = vmul.f32 %v726, %v1926
        %v1964 = vmul.f32 %v727, %v1926
        %v1965 = vmul.f32 %v728, %v1926
        %v1966 = vmul.f32 %v729, %v1926
        %v1967 = vmul.f32 %v730, %v1926
        %v1968 = vmul.f32 %v731, %v1926
        %v1969 = vmul.f32 %v732, %v1926
        %v1970 = vmul.f32 %v733, %v1926
        %v1971 = vmul.f32 %v734, %v1926
        %v1972 = vmul.f32 %v735, %v1926
        %v1973 = vmul.f32 %v736, %v1926
        %v1974 = vmul.f32 %v737, %v1926
        %v2023 = vrot.slane %v1927, 1
        %v2024 = vrot.slane %v1928, 1
        %v2025 = vsel %vm909, %v2023, %v2024
        %v2026 = vrot.slane %v1929, 1
        %v2027 = vsel %vm909, %v2024, %v2026
        %v2028 = vrot.slane %v1930, 1
        %v2029 = vrot.slane %v1931, 1
        %v2030 = vsel %vm909, %v2028, %v2029
        %v2031 = vrot.slane %v1932, 1
        %v2032 = vsel %vm909, %v2029, %v2031
        %v2033 = vrot.slane %v1933, 1
        %v2034 = vrot.slane %v1934, 1
        %v2035 = vsel %vm909, %v2033, %v2034
        %v2036 = vrot.slane %v1935, 1
        %v2037 = vsel %vm909, %v2034, %v2036
        %v2038 = vrot.slane %v1936, 1
        %v2039 = vrot.slane %v1937, 1
        %v2040 = vsel %vm909, %v2038, %v2039
        %v2041 = vrot.slane %v1938, 1
        %v2042 = vsel %vm909, %v2039, %v2041
        %v2043 = vrot.slane %v1939, 1
        %v2044 = vrot.slane %v1940, 1
        %v2045 = vsel %vm909, %v2043, %v2044
        %v2046 = vrot.slane %v1941, 1
        %v2047 = vsel %vm909, %v2044, %v2046
        %v2048 = vrot.slane %v1942, 1
        %v2049 = vrot.slane %v1943, 1
        %v2050 = vsel %vm909, %v2048, %v2049
        %v2051 = vrot.slane %v1944, 1
        %v2052 = vsel %vm909, %v2049, %v2051
        %v2053 = vrot.slane %v1945, 1
        %v2054 = vrot.slane %v1946, 1
        %v2055 = vsel %vm909, %v2053, %v2054
        %v2056 = vrot.slane %v1947, 1
        %v2057 = vsel %vm909, %v2054, %v2056
        %v2058 = vrot.slane %v1948, 1
        %v2059 = vrot.slane %v1949, 1
        %v2060 = vsel %vm909, %v2058, %v2059
        %v2061 = vrot.slane %v1950, 1
        %v2062 = vsel %vm909, %v2059, %v2061
        %v2063 = vrot.slane %v1951, 1
        %v2064 = vrot.slane %v1952, 1
        %v2065 = vsel %vm909, %v2063, %v2064
        %v2066 = vrot.slane %v1953, 1
        %v2067 = vsel %vm909, %v2064, %v2066
        %v2068 = vrot.slane %v1954, 1
        %v2069 = vrot.slane %v1955, 1
        %v2070 = vsel %vm909, %v2068, %v2069
        %v2071 = vrot.slane %v1956, 1
        %v2072 = vsel %vm909, %v2069, %v2071
        %v2073 = vrot.slane %v1957, 1
        %v2074 = vrot.slane %v1958, 1
        %v2075 = vsel %vm909, %v2073, %v2074
        %v2076 = vrot.slane %v1959, 1
        %v2077 = vsel %vm909, %v2074, %v2076
        %v2078 = vrot.slane %v1960, 1
        %v2079 = vrot.slane %v1961, 1
        %v2080 = vsel %vm909, %v2078, %v2079
        %v2081 = vrot.slane %v1962, 1
        %v2082 = vsel %vm909, %v2079, %v2081
        %v2083 = vrot.slane %v1963, 1
        %v2084 = vrot.slane %v1964, 1
        %v2085 = vsel %vm909, %v2083, %v2084
        %v2086 = vrot.slane %v1965, 1
        %v2087 = vsel %vm909, %v2084, %v2086
        %v2088 = vrot.slane %v1966, 1
        %v2089 = vrot.slane %v1967, 1
        %v2090 = vsel %vm909, %v2088, %v2089
        %v2091 = vrot.slane %v1968, 1
        %v2092 = vsel %vm909, %v2089, %v2091
        %v2093 = vrot.slane %v1969, 1
        %v2094 = vrot.slane %v1970, 1
        %v2095 = vsel %vm909, %v2093, %v2094
        %v2096 = vrot.slane %v1971, 1
        %v2097 = vsel %vm909, %v2094, %v2096
        %v2098 = vrot.slane %v1972, 1
        %v2099 = vrot.slane %v1973, 1
        %v2100 = vsel %vm909, %v2098, %v2099
        %v2101 = vrot.slane %v1974, 1
        %v2102 = vsel %vm909, %v2099, %v2101
        %v2135 = vadd.f32 %v1891, %v2025
        %v2136 = vadd.f32 %v1892, %v2027
        %v2137 = vadd.f32 %v1893, %v2030
        %v2138 = vadd.f32 %v1894, %v2032
        %v2139 = vadd.f32 %v1895, %v2035
        %v2140 = vadd.f32 %v1896, %v2037
        %v2141 = vadd.f32 %v1897, %v2040
        %v2142 = vadd.f32 %v1898, %v2042
        %v2143 = vadd.f32 %v1899, %v2045
        %v2144 = vadd.f32 %v1900, %v2047
        %v2145 = vadd.f32 %v1901, %v2050
        %v2146 = vadd.f32 %v1902, %v2052
        %v2147 = vadd.f32 %v1903, %v2055
        %v2148 = vadd.f32 %v1904, %v2057
        %v2149 = vadd.f32 %v1905, %v2060
        %v2150 = vadd.f32 %v1906, %v2062
        %v2151 = vadd.f32 %v1907, %v2065
        %v2152 = vadd.f32 %v1908, %v2067
        %v2153 = vadd.f32 %v1909, %v2070
        %v2154 = vadd.f32 %v1910, %v2072
        %v2155 = vadd.f32 %v1911, %v2075
        %v2156 = vadd.f32 %v1912, %v2077
        %v2157 = vadd.f32 %v1913, %v2080
        %v2158 = vadd.f32 %v1914, %v2082
        %v2159 = vadd.f32 %v1915, %v2085
        %v2160 = vadd.f32 %v1916, %v2087
        %v2161 = vadd.f32 %v1917, %v2090
        %v2162 = vadd.f32 %v1918, %v2092
        %v2163 = vadd.f32 %v1919, %v2095
        %v2164 = vadd.f32 %v1920, %v2097
        %v2165 = vadd.f32 %v1921, %v2100
        %v2166 = vadd.f32 %v1922, %v2102
        %v2167 = vlaneseq
        %v2168 = vshrl.u32 %v2167, 7
        %v2169 = vsub.s32 2, %v2168
        %v2170 = vrot.slane %v740, %v2169
        %v2171 = vmul.f32 %v690, %v2170
        %v2172 = vmul.f32 %v691, %v2170
        %v2173 = vmul.f32 %v692, %v2170
        %v2174 = vmul.f32 %v693, %v2170
        %v2175 = vmul.f32 %v694, %v2170
        %v2176 = vmul.f32 %v695, %v2170
        %v2177 = vmul.f32 %v696, %v2170
        %v2178 = vmul.f32 %v697, %v2170
        %v2179 = vmul.f32 %v698, %v2170
        %v2180 = vmul.f32 %v699, %v2170
        %v2181 = vmul.f32 %v700, %v2170
        %v2182 = vmul.f32 %v701, %v2170
        %v2183 = vmul.f32 %v702, %v2170
        %v2184 = vmul.f32 %v703, %v2170
        %v2185 = vmul.f32 %v704, %v2170
        %v2186 = vmul.f32 %v705, %v2170
        %v2187 = vmul.f32 %v706, %v2170
        %v2188 = vmul.f32 %v707, %v2170
        %v2189 = vmul.f32 %v708, %v2170
        %v2190 = vmul.f32 %v709, %v2170
        %v2191 = vmul.f32 %v710, %v2170
        %v2192 = vmul.f32 %v711, %v2170
        %v2193 = vmul.f32 %v712, %v2170
        %v2194 = vmul.f32 %v713, %v2170
        %v2195 = vmul.f32 %v714, %v2170
        %v2196 = vmul.f32 %v715, %v2170
        %v2197 = vmul.f32 %v716, %v2170
        %v2198 = vmul.f32 %v717, %v2170
        %v2199 = vmul.f32 %v718, %v2170
        %v2200 = vmul.f32 %v719, %v2170
        %v2201 = vmul.f32 %v720, %v2170
        %v2202 = vmul.f32 %v721, %v2170
        %v2203 = vmul.f32 %v722, %v2170
        %v2204 = vmul.f32 %v723, %v2170
        %v2205 = vmul.f32 %v724, %v2170
        %v2206 = vmul.f32 %v725, %v2170
        %v2207 = vmul.f32 %v726, %v2170
        %v2208 = vmul.f32 %v727, %v2170
        %v2209 = vmul.f32 %v728, %v2170
        %v2210 = vmul.f32 %v729, %v2170
        %v2211 = vmul.f32 %v730, %v2170
        %v2212 = vmul.f32 %v731, %v2170
        %v2213 = vmul.f32 %v732, %v2170
        %v2214 = vmul.f32 %v733, %v2170
        %v2215 = vmul.f32 %v734, %v2170
        %v2216 = vmul.f32 %v735, %v2170
        %v2217 = vmul.f32 %v736, %v2170
        %v2218 = vmul.f32 %v737, %v2170
        %v2267 = vrot.slane %v2171, 2
        %v2268 = vrot.slane %v2172, 2
        %v2269 = vsel %vm1154, %v2267, %v2268
        %v2270 = vrot.slane %v2173, 2
        %v2271 = vsel %vm1154, %v2268, %v2270
        %v2272 = vrot.slane %v2174, 2
        %v2273 = vrot.slane %v2175, 2
        %v2274 = vsel %vm1154, %v2272, %v2273
        %v2275 = vrot.slane %v2176, 2
        %v2276 = vsel %vm1154, %v2273, %v2275
        %v2277 = vrot.slane %v2177, 2
        %v2278 = vrot.slane %v2178, 2
        %v2279 = vsel %vm1154, %v2277, %v2278
        %v2280 = vrot.slane %v2179, 2
        %v2281 = vsel %vm1154, %v2278, %v2280
        %v2282 = vrot.slane %v2180, 2
        %v2283 = vrot.slane %v2181, 2
        %v2284 = vsel %vm1154, %v2282, %v2283
        %v2285 = vrot.slane %v2182, 2
        %v2286 = vsel %vm1154, %v2283, %v2285
        %v2287 = vrot.slane %v2183, 2
        %v2288 = vrot.slane %v2184, 2
        %v2289 = vsel %vm1154, %v2287, %v2288
        %v2290 = vrot.slane %v2185, 2
        %v2291 = vsel %vm1154, %v2288, %v2290
        %v2292 = vrot.slane %v2186, 2
        %v2293 = vrot.slane %v2187, 2
        %v2294 = vsel %vm1154, %v2292, %v2293
        %v2295 = vrot.slane %v2188, 2
        %v2296 = vsel %vm1154, %v2293, %v2295
        %v2297 = vrot.slane %v2189, 2
        %v2298 = vrot.slane %v2190, 2
        %v2299 = vsel %vm1154, %v2297, %v2298
        %v2300 = vrot.slane %v2191, 2
        %v2301 = vsel %vm1154, %v2298, %v2300
        %v2302 = vrot.slane %v2192, 2
        %v2303 = vrot.slane %v2193, 2
        %v2304 = vsel %vm1154, %v2302, %v2303
        %v2305 = vrot.slane %v2194, 2
        %v2306 = vsel %vm1154, %v2303, %v2305
        %v2307 = vrot.slane %v2195, 2
        %v2308 = vrot.slane %v2196, 2
        %v2309 = vsel %vm1154, %v2307, %v2308
        %v2310 = vrot.slane %v2197, 2
        %v2311 = vsel %vm1154, %v2308, %v2310
        %v2312 = vrot.slane %v2198, 2
        %v2313 = vrot.slane %v2199, 2
        %v2314 = vsel %vm1154, %v2312, %v2313
        %v2315 = vrot.slane %v2200, 2
        %v2316 = vsel %vm1154, %v2313, %v2315
        %v2317 = vrot.slane %v2201, 2
        %v2318 = vrot.slane %v2202, 2
        %v2319 = vsel %vm1154, %v2317, %v2318
        %v2320 = vrot.slane %v2203, 2
        %v2321 = vsel %vm1154, %v2318, %v2320
        %v2322 = vrot.slane %v2204, 2
        %v2323 = vrot.slane %v2205, 2
        %v2324 = vsel %vm1154, %v2322, %v2323
        %v2325 = vrot.slane %v2206, 2
        %v2326 = vsel %vm1154, %v2323, %v2325
        %v2327 = vrot.slane %v2207, 2
        %v2328 = vrot.slane %v2208, 2
        %v2329 = vsel %vm1154, %v2327, %v2328
        %v2330 = vrot.slane %v2209, 2
        %v2331 = vsel %vm1154, %v2328, %v2330
        %v2332 = vrot.slane %v2210, 2
        %v2333 = vrot.slane %v2211, 2
        %v2334 = vsel %vm1154, %v2332, %v2333
        %v2335 = vrot.slane %v2212, 2
        %v2336 = vsel %vm1154, %v2333, %v2335
        %v2337 = vrot.slane %v2213, 2
        %v2338 = vrot.slane %v2214, 2
        %v2339 = vsel %vm1154, %v2337, %v2338
        %v2340 = vrot.slane %v2215, 2
        %v2341 = vsel %vm1154, %v2338, %v2340
        %v2342 = vrot.slane %v2216, 2
        %v2343 = vrot.slane %v2217, 2
        %v2344 = vsel %vm1154, %v2342, %v2343
        %v2345 = vrot.slane %v2218, 2
        %v2346 = vsel %vm1154, %v2343, %v2345
        %v2379 = vadd.f32 %v2135, %v2269
        %v2380 = vadd.f32 %v2136, %v2271
        %v2381 = vadd.f32 %v2137, %v2274
        %v2382 = vadd.f32 %v2138, %v2276
        %v2383 = vadd.f32 %v2139, %v2279
        %v2384 = vadd.f32 %v2140, %v2281
        %v2385 = vadd.f32 %v2141, %v2284
        %v2386 = vadd.f32 %v2142, %v2286
        %v2387 = vadd.f32 %v2143, %v2289
        %v2388 = vadd.f32 %v2144, %v2291
        %v2389 = vadd.f32 %v2145, %v2294
        %v2390 = vadd.f32 %v2146, %v2296
        %v2391 = vadd.f32 %v2147, %v2299
        %v2392 = vadd.f32 %v2148, %v2301
        %v2393 = vadd.f32 %v2149, %v2304
        %v2394 = vadd.f32 %v2150, %v2306
        %v2395 = vadd.f32 %v2151, %v2309
        %v2396 = vadd.f32 %v2152, %v2311
        %v2397 = vadd.f32 %v2153, %v2314
        %v2398 = vadd.f32 %v2154, %v2316
        %v2399 = vadd.f32 %v2155, %v2319
        %v2400 = vadd.f32 %v2156, %v2321
        %v2401 = vadd.f32 %v2157, %v2324
        %v2402 = vadd.f32 %v2158, %v2326
        %v2403 = vadd.f32 %v2159, %v2329
        %v2404 = vadd.f32 %v2160, %v2331
        %v2405 = vadd.f32 %v2161, %v2334
        %v2406 = vadd.f32 %v2162, %v2336
        %v2407 = vadd.f32 %v2163, %v2339
        %v2408 = vadd.f32 %v2164, %v2341
        %v2409 = vadd.f32 %v2165, %v2344
        %v2410 = vadd.f32 %v2166, %v2346
        %v2411 = vpack.c.bf16 %v2380, %v2379
        %v2412 = vpack.c.bf16 %v2382, %v2381
        %v2413 = vpack.c.bf16 %v2384, %v2383
        %v2414 = vpack.c.bf16 %v2386, %v2385
        %v2415 = vpack.c.bf16 %v2388, %v2387
        %v2416 = vpack.c.bf16 %v2390, %v2389
        %v2417 = vpack.c.bf16 %v2392, %v2391
        %v2418 = vpack.c.bf16 %v2394, %v2393
        %v2419 = vpack.c.bf16 %v2396, %v2395
        %v2420 = vpack.c.bf16 %v2398, %v2397
        %v2421 = vpack.c.bf16 %v2400, %v2399
        %v2422 = vpack.c.bf16 %v2402, %v2401
        %v2423 = vpack.c.bf16 %v2404, %v2403
        %v2424 = vpack.c.bf16 %v2406, %v2405
        %v2425 = vpack.c.bf16 %v2408, %v2407
        %v2426 = vpack.c.bf16 %v2410, %v2409
        %v2427 = vld [vmem:[%s4] sm:$0xf]
        %v2428 = vld [vmem:[%s4 + $0x4] sm:$0xf]
        %v2429 = vld [vmem:[%s4 + $0x8] sm:$0xf]
        %v2430 = vld [vmem:[%s4 + $0xc] sm:$0xf]
        %v2431 = vld [vmem:[%s5] sm:$0x1]
        %v2433 = vlaneseq
        %v2434 = vshrl.u32 %v2433, 7
        %v2435 = vsub.s32 0, %v2434
        %v2436 = vrot.slane %v2431, %v2435
        %v2442 = vunpack.c.l.b16 %v2427
        %v2443 = vunpack.c.l.b16 %v2428
        %v2444 = vunpack.c.l.b16 %v2429
        %v2445 = vunpack.c.l.b16 %v2430
        %v2446 = vpack.c.b16 %v2443, %v2442
        %v2447 = vpack.c.b16 %v2445, %v2444
        %v2451 = vsel %vm386, %v2411, 0
        %v2454 = vsel %vm386, %v2412, 0
        %v2457 = vsel %vm386, %v2413, 0
        %v2460 = vsel %vm386, %v2414, 0
        %v2463 = vsel %vm386, %v2415, 0
        %v2466 = vsel %vm386, %v2416, 0
        %v2469 = vsel %vm386, %v2417, 0
        %v2472 = vsel %vm386, %v2418, 0
        %v2475 = vsel %vm386, %v2419, 0
        %v2478 = vsel %vm386, %v2420, 0
        %v2481 = vsel %vm386, %v2421, 0
        %v2484 = vsel %vm386, %v2422, 0
        %v2487 = vsel %vm386, %v2423, 0
        %v2490 = vsel %vm386, %v2424, 0
        %v2493 = vsel %vm386, %v2425, 0
        %v2496 = vsel %vm386, %v2426, 0
        %2498 = vmatprep.subr.bf16.mxu0 0
        %2499 = vmatpush1.bf16.msra.mxu0 0
        %2500 = vmatprep.subr.bf16.mxu0 0
        %2501 = vmatpush1.bf16.msra.mxu0 0
        %2502 = vmatprep.subr.bf16.mxu0 0
        %2503 = vmatpush1.bf16.msra.mxu0 0
        %2504 = vmatprep.subr.bf16.mxu0 0
        %2505 = vmatpush1.bf16.msra.mxu0 0
        %2506 = vmatprep.subr.bf16.mxu0 0
        %2507 = vmatpush1.bf16.msra.mxu0 0
        %2508 = vmatprep.subr.bf16.mxu0 0
        %2509 = vmatpush1.bf16.msra.mxu0 0
        %2510 = vmatprep.subr.bf16.mxu0 0
        %2511 = vmatpush1.bf16.msra.mxu0 %v2447
        %2512 = vmatprep.subr.bf16.mxu0 0
        %2513 = vmatpush1.bf16.msra.mxu0 %v2446
        %2514 = vmatprep.subr.bf16.mxu0 0
        %2515 = vmatpush2.bf16.msra.mxu0 0
        %2516 = vmatprep.subr.bf16.mxu0 0
        %2517 = vmatpush2.bf16.msra.mxu0 0
        %2518 = vmatprep.subr.bf16.mxu0 0
        %2519 = vmatpush2.bf16.msra.mxu0 0
        %2520 = vmatprep.subr.bf16.mxu0 0
        %2521 = vmatpush2.bf16.msra.mxu0 0
        %2522 = vmatprep.subr.bf16.mxu0 0
        %2523 = vmatpush2.bf16.msra.mxu0 0
        %2524 = vmatprep.subr.bf16.mxu0 0
        %2525 = vmatpush2.bf16.msra.mxu0 0
        %2526 = vmatprep.subr.bf16.mxu0 0
        %2527 = vmatpush2.bf16.msra.mxu0 0
        %2528 = vmatprep.subr.bf16.mxu0 0
        %2529 = vmatpush2.bf16.msra.mxu0 0
        %2530 = vmatprep.mubr.bf16.mxu0 0
        %2531 = vmatmul.mubr.bf16.gmra.mxu0 %v2451
        %v2532 = vpop.f32.mrf.mxu0
        %v2533 = vadd.f32 %v2436, %v2532
        %v2534 = vpop.f32.mrf.mxu0
        %v2535 = vpop.f32.mrf.mxu0
        %v2536 = vadd.f32 %v2436, %v2535
        %v2537 = vpop.f32.mrf.mxu0
        %2538 = vmatprep.mubr.bf16.mxu0 0
        %2539 = vmatmul.mubr.bf16.gmra.mxu0 %v2454
        %v2540 = vpop.f32.mrf.mxu0
        %v2541 = vadd.f32 %v2436, %v2540
        %v2542 = vpop.f32.mrf.mxu0
        %v2543 = vpop.f32.mrf.mxu0
        %v2544 = vadd.f32 %v2436, %v2543
        %v2545 = vpop.f32.mrf.mxu0
        %2546 = vmatprep.mubr.bf16.mxu0 0
        %2547 = vmatmul.mubr.bf16.gmra.mxu0 %v2457
        %v2548 = vpop.f32.mrf.mxu0
        %v2549 = vadd.f32 %v2436, %v2548
        %v2550 = vpop.f32.mrf.mxu0
        %v2551 = vpop.f32.mrf.mxu0
        %v2552 = vadd.f32 %v2436, %v2551
        %v2553 = vpop.f32.mrf.mxu0
        %2554 = vmatprep.mubr.bf16.mxu0 0
        %2555 = vmatmul.mubr.bf16.gmra.mxu0 %v2460
        %v2556 = vpop.f32.mrf.mxu0
        %v2557 = vadd.f32 %v2436, %v2556
        %v2558 = vpop.f32.mrf.mxu0
        %v2559 = vpop.f32.mrf.mxu0
        %v2560 = vadd.f32 %v2436, %v2559
        %v2561 = vpop.f32.mrf.mxu0
        %2562 = vmatprep.mubr.bf16.mxu0 0
        %2563 = vmatmul.mubr.bf16.gmra.mxu0 %v2463
        %v2564 = vpop.f32.mrf.mxu0
        %v2565 = vadd.f32 %v2436, %v2564
        %v2566 = vpop.f32.mrf.mxu0
        %v2567 = vpop.f32.mrf.mxu0
        %v2568 = vadd.f32 %v2436, %v2567
        %v2569 = vpop.f32.mrf.mxu0
        %2570 = vmatprep.mubr.bf16.mxu0 0
        %2571 = vmatmul.mubr.bf16.gmra.mxu0 %v2466
        %v2572 = vpop.f32.mrf.mxu0
        %v2573 = vadd.f32 %v2436, %v2572
        %v2574 = vpop.f32.mrf.mxu0
        %v2575 = vpop.f32.mrf.mxu0
        %v2576 = vadd.f32 %v2436, %v2575
        %v2577 = vpop.f32.mrf.mxu0
        %2578 = vmatprep.mubr.bf16.mxu0 0
        %2579 = vmatmul.mubr.bf16.gmra.mxu0 %v2469
        %v2580 = vpop.f32.mrf.mxu0
        %v2581 = vadd.f32 %v2436, %v2580
        %v2582 = vpop.f32.mrf.mxu0
        %v2583 = vpop.f32.mrf.mxu0
        %v2584 = vadd.f32 %v2436, %v2583
        %v2585 = vpop.f32.mrf.mxu0
        %2586 = vmatprep.mubr.bf16.mxu0 0
        %2587 = vmatmul.mubr.bf16.gmra.mxu0 %v2472
        %v2588 = vpop.f32.mrf.mxu0
        %v2589 = vadd.f32 %v2436, %v2588
        %v2590 = vpop.f32.mrf.mxu0
        %v2591 = vpop.f32.mrf.mxu0
        %v2592 = vadd.f32 %v2436, %v2591
        %v2593 = vpop.f32.mrf.mxu0
        %2594 = vmatprep.mubr.bf16.mxu0 0
        %2595 = vmatmul.mubr.bf16.gmra.mxu0 %v2475
        %v2596 = vpop.f32.mrf.mxu0
        %v2597 = vadd.f32 %v2436, %v2596
        %v2598 = vpop.f32.mrf.mxu0
        %v2599 = vpop.f32.mrf.mxu0
        %v2600 = vadd.f32 %v2436, %v2599
        %v2601 = vpop.f32.mrf.mxu0
        %2602 = vmatprep.mubr.bf16.mxu0 0
        %2603 = vmatmul.mubr.bf16.gmra.mxu0 %v2478
        %v2604 = vpop.f32.mrf.mxu0
        %v2605 = vadd.f32 %v2436, %v2604
        %v2606 = vpop.f32.mrf.mxu0
        %v2607 = vpop.f32.mrf.mxu0
        %v2608 = vadd.f32 %v2436, %v2607
        %v2609 = vpop.f32.mrf.mxu0
        %2610 = vmatprep.mubr.bf16.mxu0 0
        %2611 = vmatmul.mubr.bf16.gmra.mxu0 %v2481
        %v2612 = vpop.f32.mrf.mxu0
        %v2613 = vadd.f32 %v2436, %v2612
        %v2614 = vpop.f32.mrf.mxu0
        %v2615 = vpop.f32.mrf.mxu0
        %v2616 = vadd.f32 %v2436, %v2615
        %v2617 = vpop.f32.mrf.mxu0
        %2618 = vmatprep.mubr.bf16.mxu0 0
        %2619 = vmatmul.mubr.bf16.gmra.mxu0 %v2484
        %v2620 = vpop.f32.mrf.mxu0
        %v2621 = vadd.f32 %v2436, %v2620
        %v2622 = vpop.f32.mrf.mxu0
        %v2623 = vpop.f32.mrf.mxu0
        %v2624 = vadd.f32 %v2436, %v2623
        %v2625 = vpop.f32.mrf.mxu0
        %2626 = vmatprep.mubr.bf16.mxu0 0
        %2627 = vmatmul.mubr.bf16.gmra.mxu0 %v2487
        %v2628 = vpop.f32.mrf.mxu0
        %v2629 = vadd.f32 %v2436, %v2628
        %v2630 = vpop.f32.mrf.mxu0
        %v2631 = vpop.f32.mrf.mxu0
        %v2632 = vadd.f32 %v2436, %v2631
        %v2633 = vpop.f32.mrf.mxu0
        %2634 = vmatprep.mubr.bf16.mxu0 0
        %2635 = vmatmul.mubr.bf16.gmra.mxu0 %v2490
        %v2636 = vpop.f32.mrf.mxu0
        %v2637 = vadd.f32 %v2436, %v2636
        %v2638 = vpop.f32.mrf.mxu0
        %v2639 = vpop.f32.mrf.mxu0
        %v2640 = vadd.f32 %v2436, %v2639
        %v2641 = vpop.f32.mrf.mxu0
        %2642 = vmatprep.mubr.bf16.mxu0 0
        %2643 = vmatmul.mubr.bf16.gmra.mxu0 %v2493
        %v2644 = vpop.f32.mrf.mxu0
        %v2645 = vadd.f32 %v2436, %v2644
        %v2646 = vpop.f32.mrf.mxu0
        %v2647 = vpop.f32.mrf.mxu0
        %v2648 = vadd.f32 %v2436, %v2647
        %v2649 = vpop.f32.mrf.mxu0
        %2650 = vmatprep.mubr.bf16.mxu0 0
        %2651 = vmatmul.mubr.bf16.gmra.mxu0 %v2496
        %v2652 = vpop.f32.mrf.mxu0
        %v2653 = vadd.f32 %v2436, %v2652
        %v2654 = vpop.f32.mrf.mxu0
        %v2655 = vpop.f32.mrf.mxu0
        %v2656 = vadd.f32 %v2436, %v2655
        %v2657 = vpop.f32.mrf.mxu0
        %2658 = vdwg.mxu0
        %2659 = vst.msk [vmem:[%s244] sm:$0xff] %vm386, %v2533
        %2660 = vst.msk [vmem:[%s244 + $0x8] sm:$0xff] %vm386, %v2536
        %2661 = vst.msk [vmem:[%s244 + $0x10] sm:$0xff] %vm386, %v2541
        %2662 = vst.msk [vmem:[%s244 + $0x18] sm:$0xff] %vm386, %v2544
        %2663 = vst.msk [vmem:[%s244 + $0x20] sm:$0xff] %vm386, %v2549
        %2664 = vst.msk [vmem:[%s244 + $0x28] sm:$0xff] %vm386, %v2552
        %2665 = vst.msk [vmem:[%s244 + $0x30] sm:$0xff] %vm386, %v2557
        %2666 = vst.msk [vmem:[%s244 + $0x38] sm:$0xff] %vm386, %v2560
        %2667 = vst.msk [vmem:[%s244 + $0x40] sm:$0xff] %vm386, %v2565
        %2668 = vst.msk [vmem:[%s244 + $0x48] sm:$0xff] %vm386, %v2568
        %2669 = vst.msk [vmem:[%s244 + $0x50] sm:$0xff] %vm386, %v2573
        %2670 = vst.msk [vmem:[%s244 + $0x58] sm:$0xff] %vm386, %v2576
        %2671 = vst.msk [vmem:[%s244 + $0x60] sm:$0xff] %vm386, %v2581
        %2672 = vst.msk [vmem:[%s244 + $0x68] sm:$0xff] %vm386, %v2584
        %2673 = vst.msk [vmem:[%s244 + $0x70] sm:$0xff] %vm386, %v2589
        %2674 = vst.msk [vmem:[%s244 + $0x78] sm:$0xff] %vm386, %v2592
        %2675 = vst.msk [vmem:[%s244 + $0x80] sm:$0xff] %vm386, %v2597
        %2676 = vst.msk [vmem:[%s244 + $0x88] sm:$0xff] %vm386, %v2600
        %2677 = vst.msk [vmem:[%s244 + $0x90] sm:$0xff] %vm386, %v2605
        %2678 = vst.msk [vmem:[%s244 + $0x98] sm:$0xff] %vm386, %v2608
        %2679 = vst.msk [vmem:[%s244 + $0xa0] sm:$0xff] %vm386, %v2613
        %2680 = vst.msk [vmem:[%s244 + $0xa8] sm:$0xff] %vm386, %v2616
        %2681 = vst.msk [vmem:[%s244 + $0xb0] sm:$0xff] %vm386, %v2621
        %2682 = vst.msk [vmem:[%s244 + $0xb8] sm:$0xff] %vm386, %v2624
        %2683 = vst.msk [vmem:[%s244 + $0xc0] sm:$0xff] %vm386, %v2629
        %2684 = vst.msk [vmem:[%s244 + $0xc8] sm:$0xff] %vm386, %v2632
        %2685 = vst.msk [vmem:[%s244 + $0xd0] sm:$0xff] %vm386, %v2637
        %2686 = vst.msk [vmem:[%s244 + $0xd8] sm:$0xff] %vm386, %v2640
        %2687 = vst.msk [vmem:[%s244 + $0xe0] sm:$0xff] %vm386, %v2645
        %2688 = vst.msk [vmem:[%s244 + $0xe8] sm:$0xff] %vm386, %v2648
        %2689 = vst.msk [vmem:[%s244 + $0xf0] sm:$0xff] %vm386, %v2653
        %2690 = vst.msk [vmem:[%s244 + $0xf8] sm:$0xff] %vm386, %v2656
        %s2691 = sand.u32 %s159, 1
        %s2692 = scalar_lea.sflag [#allocation4], %s2691
        %s2693 = sand.u32 %s159, 1
        %s2694 = smul.addr %s2693, 256
        %s2695 = scalar_lea.vmem [#allocation3], %s2694
        // Predicated region
        $region45: #{local_agg_forward.1} parent=43 // pred_check
          %p2696 = pneg %p169
        $region46: #{local_agg_forward.1} parent=43 // pred_check_branch
          %2698 = sbr.rel (%p2696) target = $region48
        $region47: #{local_agg_forward.1} parent=43 // pred_region
          %s2700 = ssub.s32 4096, 4096
          %2701 = vsyncadd %s2692, %s2700
          %s2702 = smul.addr %s20, 32
          %s2703 = smul.addr %s2702, 128
          %s2704 = scalar_lea.hbm %s6, %s2703
          %s2705 = sshll.u32 %s2695, 4
          %s2706 = int_to_ptr.vmem [resolvable:$true] %s2705
          %2711 = dma.vmem_to_hbm [thread:$0]  %s2706, 4096, %s2704, %s2692, 128, 128, 8
        $region48: #{local_agg_forward.1} parent=43 // pred_fallthru
          _
      $region44: #{local_agg_forward.1} parent=5 // pred_fallthru
        _
      %p2712 = scmp.le.s32.totalorder 2, %s15
      // Predicated region
      $region49: #{local_agg_forward.1} parent=5 // pred_check
        %p2713 = pneg %p2712
      $region50: #{local_agg_forward.1} parent=5 // pred_check_branch
        %2715 = sbr.rel (%p2713) target = $region52
      $region51: #{local_agg_forward.1} parent=5 // pred_region
        %s2716 = ssub.s32 %s15, 2
        // Predicated region
        $region53: #{local_agg_forward.1} parent=51 // pred_check
          %p2717 = pneg %p175
        $region54: #{local_agg_forward.1} parent=51 // pred_check_branch
          %2719 = sbr.rel (%p2717) target = $region56
        $region55: #{local_agg_forward.1} parent=51 // pred_region
          %s2720 = sand.u32 %s160, 1
          %s2721 = scalar_lea.sflag [#allocation4], %s2720
          %s2722 = sand.u32 %s160, 1
          %s2723 = smul.addr %s2722, 256
          %s2724 = scalar_lea.vmem [#allocation3], %s2723
          %2725 = dma.done %s2721, 4096
        $region56: #{local_agg_forward.1} parent=51 // pred_fallthru
          _
      $region52: #{local_agg_forward.1} parent=5 // pred_fallthru
        _
    $region6: #{local_agg_forward.1} parent=1 // loop_footer
      %s19 = sadd.s32 1, %s15
    $region7: #{local_agg_forward.1} parent=1 // loop_footer_branch
      %14 = sbr.rel target = $region3
    $region8: #{local_agg_forward.1} parent=1 // loop_exit
      _
    %2726 = vsyncpa [#allocation4], 1
    %s2727 = scalar_lea.sflag [#allocation4], 1
    %2728 = vsyncpa %s2727, 1

</llo_original>
